<compile_context>
chip_gen: v7x
topology: tpu7x:2x2x1
jax: 0.10.0
libtpu: 0.0.40
codegen_flags: <defaults>
</compile_context>

<pallas_src>
import functools

import jax
import jax.numpy as jnp
from jax.experimental import pallas as pl
from jax.experimental.pallas import tpu as pltpu

LANE = 128
SUBLANE = 8


def _round_up(n, m):
    return ((n + m - 1) // m) * m


def autoencoder_kernel(x_ref,
                       w1_ref, b1_ref,
                       w2_ref, b2_ref,
                       w34_ref, b34_ref,
                       w5_ref, b5_ref,
                       w6_ref, b6_ref,
                       o_ref):
    # bf16 operands for the MXU; accumulation + bias/ReLU in f32 on the VPU.
    x = x_ref[...].astype(jnp.bfloat16)

    # --- encoder ---
    h = jnp.dot(x, w1_ref[...], preferred_element_type=jnp.float32) + b1_ref[...]
    h = jnp.maximum(h, 0.0).astype(jnp.bfloat16)                      # relu(encoder1)
    h = jnp.dot(h, w2_ref[...], preferred_element_type=jnp.float32) + b2_ref[...]
    h = jnp.maximum(h, 0.0).astype(jnp.bfloat16)                      # relu(encoder2)

    # --- encoder3 + decoder1 fused (linear composition, no ReLU in between) ---
    d = jnp.dot(h, w34_ref[...], preferred_element_type=jnp.float32) + b34_ref[...]
    d = jnp.maximum(d, 0.0).astype(jnp.bfloat16)                      # relu(decoder1)

    # --- decoder ---
    d = jnp.dot(d, w5_ref[...], preferred_element_type=jnp.float32) + b5_ref[...]
    d = jnp.maximum(d, 0.0).astype(jnp.bfloat16)                      # relu(decoder2)
    out = jnp.dot(d, w6_ref[...], preferred_element_type=jnp.float32) + b6_ref[...]

    o_ref[...] = out.astype(o_ref.dtype)                              # decoder3 (no relu)


def pack_params(params, input_dim):
    """params: 6 x (W[in, out] f32, b[1, out] f32), W already pre-transposed.

    * Fuses encoder3 -> decoder1 into a single [64, 64] layer (exact in f32,
      quantized once to bf16), so no latent-lane padding is needed.
    * Zero-pads the feature dim to 128 lanes (w1 rows, w6 cols, b6) so the
      kernel's input/output tiles are lane-dense; padded channels are exact 0.
    * Weights cast to bf16 (MXU operand dtype); biases stay f32.
    Returns the packed param list; packed[0].shape[0] is the lane-padded
    feature dim.
    """
    (w1, b1), (w2, b2), (w3, b3), (w4, b4), (w5, b5), (w6, b6) = params

    # Linear fusion of encoder3 -> decoder1 (done in f32).
    w34 = w3 @ w4                      # [64, 64]
    b34 = b3 @ w4 + b4                 # [1, 64]

    # Lane-dense feature dim.
    ip = max(_round_up(input_dim, LANE), LANE)
    pad = ip - input_dim
    if pad:
        w1 = jnp.pad(w1, ((0, pad), (0, 0)))   # [ip, 128]  (zero rows -> no effect)
        w6 = jnp.pad(w6, ((0, 0), (0, pad)))   # [128, ip]  (zero cols -> zero padded outputs)
        b6 = jnp.pad(b6, ((0, 0), (0, pad)))   # [1,  ip]

    packed = []
    for w, b in ((w1, b1), (w2, b2), (w34, b34), (w5, b5), (w6, b6)):
        packed.append(w.astype(jnp.bfloat16))
        packed.append(b.astype(jnp.float32))
    return packed


@functools.partial(jax.jit, static_argnames=("tb",))
def autoencoder_forward(x, packed, *, tb=2048):
    """x: [B, input_dim] f32. packed: output of pack_params. Returns [B, input_dim] f32."""
    B, input_dim = x.shape
    ip = packed[0].shape[0]            # lane-padded feature dim (multiple of 128)

    # Batch tile selection: one big tile when it fits, otherwise an even number
    # of grid steps (balanced across v7x's 2 TensorCores; no-op on v5e/v6e).
    rb = _round_up(B, SUBLANE)
    if rb <= tb:
        steps = 1
        TB = rb
    else:
        steps = -(-rb // tb)           # ceil
        if steps % 2:
            steps += 1                 # keep the parallel batch axis megacore-balanced
        TB = _round_up(-(-rb // steps), SUBLANE)
    pB = TB * steps

    xp = jnp.pad(x, ((0, pB - B), (0, ip - input_dim)))

    # Activation tiles march over the batch; weights/biases use full-array blocks
    # with a constant index_map -> fetched once, VMEM-resident for all steps.
    act_spec = pl.BlockSpec((TB, ip), lambda i: (i, 0))
    weight_specs = [pl.BlockSpec(a.shape, lambda i: (0, 0)) for a in packed]

    flops = sum(2 * pB * w.shape[0] * w.shape[1] for w in packed[0::2])
    bytes_accessed = (pB * ip * 4 * 2                             # x in + out (f32)
                      + sum(w.size * 2 for w in packed[0::2])     # bf16 weights
                      + sum(b.size * 4 for b in packed[1::2]))    # f32 biases

    out = pl.pallas_call(
        autoencoder_kernel,
        out_shape=jax.ShapeDtypeStruct((pB, ip), jnp.float32),
        grid=(steps,),
        in_specs=[act_spec] + weight_specs,
        out_specs=act_spec,
        compiler_params=pltpu.CompilerParams(
            dimension_semantics=("parallel",),
            vmem_limit_bytes=32 * 1024 * 1024),   # raises v5e's 16 MiB scoped default
        cost_estimate=pl.CostEstimate(flops=flops, transcendentals=0,
                                      bytes_accessed=bytes_accessed),
    )(xp, *packed)

    return out[:B, :input_dim]


def init_linear(key, fan_in, fan_out):
    """Deterministic init mimicking nn.Linear's uniform(-1/sqrt(fan_in), 1/sqrt(fan_in)).
    Weight returned already transposed to [in, out]; bias as [1, out]."""
    kw, kb = jax.random.split(key)
    bound = 1.0 / jnp.sqrt(jnp.float32(fan_in))
    w = jax.random.uniform(kw, (fan_in, fan_out), jnp.float32, -bound, bound)
    b = jax.random.uniform(kb, (1, fan_out), jnp.float32, -bound, bound)
    return w, b


def reference_forward_f32(x, params):
    """Pure f32 reference matching the PyTorch module exactly."""
    h = x
    for i, (w, b) in enumerate(params):
        h = h @ w + b
        if i not in (2, 5):            # no relu after encoder3 / decoder3
            h = jnp.maximum(h, 0.0)
    return h


def reference_forward_fused_bf16(x, params):
    """Mirrors the kernel's numerics: encoder3+decoder1 fused in f32 then quantized
    once to bf16; bf16 matmul operands; f32 accumulation / bias / ReLU."""
    (w1, b1), (w2, b2), (w3, b3), (w4, b4), (w5, b5), (w6, b6) = params
    w34 = w3 @ w4
    b34 = b3 @ w4 + b4
    layers = [(w1, b1, True), (w2, b2, True), (w34, b34, True),
              (w5, b5, True), (w6, b6, False)]
    h = x
    for w, b, relu in layers:
        h = jnp.dot(h.astype(jnp.bfloat16), w.astype(jnp.bfloat16),
                    preferred_element_type=jnp.float32) + b
        if relu:
            h = jnp.maximum(h, 0.0)
    return h


if __name__ == "__main__":
    input_dim = 32
    latent_dim = 8
    batch = 555          # not a multiple of 8 -> exercises batch padding + lane padding

    key = jax.random.PRNGKey(0)
    keys = jax.random.split(key, 7)

    dims = [(input_dim, 128), (128, 64), (64, latent_dim),
            (latent_dim, 64), (64, 128), (128, input_dim)]
    params = [init_linear(keys[i], fi, fo) for i, (fi, fo) in enumerate(dims)]

    x = jax.random.normal(keys[6], (batch, input_dim), jnp.float32)
    packed = pack_params(params, input_dim)

    y_f32_ref = reference_forward_f32(x, params)
    y_bf16_ref = reference_forward_fused_bf16(x, params)

    # Run 1: single big tile (default tb).
    y = autoencoder_forward(x, packed)
    jax.block_until_ready(y)
    assert y.shape == (batch, input_dim)
    assert jnp.allclose(y, y_bf16_ref, atol=2e-2, rtol=2e-2), "mismatch vs fused-bf16 reference"
    assert jnp.allclose(y, y_f32_ref, atol=1e-1, rtol=1e-1), "mismatch vs f32 reference"

    # Run 2: tiny tb forces a multi-step (even) batch grid -> exercises the
    # pipelined / megacore-balanced path.
    y2 = autoencoder_forward(x, packed, tb=128)
    jax.block_until_ready(y2)
    assert y2.shape == (batch, input_dim)
    assert jnp.allclose(y2, y_bf16_ref, atol=2e-2, rtol=2e-2), "multi-step mismatch vs fused-bf16 reference"
    assert jnp.allclose(y2, y_f32_ref, atol=1e-1, rtol=1e-1), "multi-step mismatch vs f32 reference"

    print("KERNEL_OK")
</pallas_src>

<mosaic_0001>
module attributes {stable_mosaic.version = 11 : i64} {
  func.func @autoencoder_kernel(%arg0: i32, %arg1: memref<560x128xf32, #tpu.memory_space<vmem>>, %arg2: memref<128x128xbf16, #tpu.memory_space<vmem>>, %arg3: memref<1x128xf32, #tpu.memory_space<vmem>>, %arg4: memref<128x64xbf16, #tpu.memory_space<vmem>>, %arg5: memref<1x64xf32, #tpu.memory_space<vmem>>, %arg6: memref<64x64xbf16, #tpu.memory_space<vmem>>, %arg7: memref<1x64xf32, #tpu.memory_space<vmem>>, %arg8: memref<64x128xbf16, #tpu.memory_space<vmem>>, %arg9: memref<1x128xf32, #tpu.memory_space<vmem>>, %arg10: memref<128x128xbf16, #tpu.memory_space<vmem>>, %arg11: memref<1x128xf32, #tpu.memory_space<vmem>>, %arg12: memref<560x128xf32, #tpu.memory_space<vmem>>) attributes {dimension_semantics = [#tpu.dimension_semantics<parallel>], iteration_bounds = array<i64: 1>, scalar_prefetch = 0 : i64, scratch_operands = 0 : i64, tpu.core_type = #tpu.core_type<tc>, window_params = [{transform_indices = @transform_0, window_bounds = array<i64: 560, 128>}, {pipeline_mode = #tpu.pipeline_mode<synchronous>, transform_indices = @transform_1, window_bounds = array<i64: 128, 128>}, {pipeline_mode = #tpu.pipeline_mode<synchronous>, transform_indices = @transform_2, window_bounds = array<i64: 1, 128>}, {pipeline_mode = #tpu.pipeline_mode<synchronous>, transform_indices = @transform_3, window_bounds = array<i64: 128, 64>}, {pipeline_mode = #tpu.pipeline_mode<synchronous>, transform_indices = @transform_4, window_bounds = array<i64: 1, 64>}, {pipeline_mode = #tpu.pipeline_mode<synchronous>, transform_indices = @transform_5, window_bounds = array<i64: 64, 64>}, {pipeline_mode = #tpu.pipeline_mode<synchronous>, transform_indices = @transform_6, window_bounds = array<i64: 1, 64>}, {pipeline_mode = #tpu.pipeline_mode<synchronous>, transform_indices = @transform_7, window_bounds = array<i64: 64, 128>}, {pipeline_mode = #tpu.pipeline_mode<synchronous>, transform_indices = @transform_8, window_bounds = array<i64: 1, 128>}, {pipeline_mode = #tpu.pipeline_mode<synchronous>, transform_indices = @transform_9, window_bounds = array<i64: 128, 128>}, {pipeline_mode = #tpu.pipeline_mode<synchronous>, transform_indices = @transform_10, window_bounds = array<i64: 1, 128>}, {transform_indices = @transform_11, window_bounds = array<i64: 560, 128>}]} {
    %c0 = arith.constant 0 : index
    %c0_0 = arith.constant 0 : index
    %0 = vector.load %arg1[%c0, %c0_0] : memref<560x128xf32, #tpu.memory_space<vmem>>, vector<560x128xf32>
    %1 = arith.truncf %0 : vector<560x128xf32> to vector<560x128xbf16>
    %c0_1 = arith.constant 0 : index
    %c0_2 = arith.constant 0 : index
    %2 = vector.load %arg2[%c0_1, %c0_2] : memref<128x128xbf16, #tpu.memory_space<vmem>>, vector<128x128xbf16>
    %cst = arith.constant dense<0.000000e+00> : vector<560x128xf32>
    %3 = tpu.matmul %1, %2, %cst {dimension_numbers = #tpu.dot_dimension_numbers<[1], [0], [0], [1], [0, 0, 1, 1], [], []>} : vector<560x128xbf16>, vector<128x128xbf16>, vector<560x128xf32> -> vector<560x128xf32>
    %c0_3 = arith.constant 0 : index
    %c0_4 = arith.constant 0 : index
    %4 = vector.load %arg3[%c0_3, %c0_4] : memref<1x128xf32, #tpu.memory_space<vmem>>, vector<1x128xf32>
    %5 = vector.broadcast %4 : vector<1x128xf32> to vector<560x128xf32>
    %6 = arith.addf %3, %5 : vector<560x128xf32>
    %cst_5 = arith.constant 0.000000e+00 : f32
    %7 = vector.broadcast %cst_5 : f32 to vector<560x128xf32>
    %8 = arith.maximumf %6, %7 : vector<560x128xf32>
    %9 = arith.truncf %8 : vector<560x128xf32> to vector<560x128xbf16>
    %c0_6 = arith.constant 0 : index
    %c0_7 = arith.constant 0 : index
    %10 = vector.load %arg4[%c0_6, %c0_7] : memref<128x64xbf16, #tpu.memory_space<vmem>>, vector<128x64xbf16>
    %cst_8 = arith.constant dense<0.000000e+00> : vector<560x64xf32>
    %11 = tpu.matmul %9, %10, %cst_8 {dimension_numbers = #tpu.dot_dimension_numbers<[1], [0], [0], [1], [0, 0, 1, 1], [], []>} : vector<560x128xbf16>, vector<128x64xbf16>, vector<560x64xf32> -> vector<560x64xf32>
    %c0_9 = arith.constant 0 : index
    %c0_10 = arith.constant 0 : index
    %12 = vector.load %arg5[%c0_9, %c0_10] : memref<1x64xf32, #tpu.memory_space<vmem>>, vector<1x64xf32>
    %13 = vector.broadcast %12 : vector<1x64xf32> to vector<560x64xf32>
    %14 = arith.addf %11, %13 : vector<560x64xf32>
    %cst_11 = arith.constant 0.000000e+00 : f32
    %15 = vector.broadcast %cst_11 : f32 to vector<560x64xf32>
    %16 = arith.maximumf %14, %15 : vector<560x64xf32>
    %17 = arith.truncf %16 : vector<560x64xf32> to vector<560x64xbf16>
    %c0_12 = arith.constant 0 : index
    %c0_13 = arith.constant 0 : index
    %18 = vector.load %arg6[%c0_12, %c0_13] : memref<64x64xbf16, #tpu.memory_space<vmem>>, vector<64x64xbf16>
    %cst_14 = arith.constant dense<0.000000e+00> : vector<560x64xf32>
    %19 = tpu.matmul %17, %18, %cst_14 {dimension_numbers = #tpu.dot_dimension_numbers<[1], [0], [0], [1], [0, 0, 1, 1], [], []>} : vector<560x64xbf16>, vector<64x64xbf16>, vector<560x64xf32> -> vector<560x64xf32>
    %c0_15 = arith.constant 0 : index
    %c0_16 = arith.constant 0 : index
    %20 = vector.load %arg7[%c0_15, %c0_16] : memref<1x64xf32, #tpu.memory_space<vmem>>, vector<1x64xf32>
    %21 = vector.broadcast %20 : vector<1x64xf32> to vector<560x64xf32>
    %22 = arith.addf %19, %21 : vector<560x64xf32>
    %cst_17 = arith.constant 0.000000e+00 : f32
    %23 = vector.broadcast %cst_17 : f32 to vector<560x64xf32>
    %24 = arith.maximumf %22, %23 : vector<560x64xf32>
    %25 = arith.truncf %24 : vector<560x64xf32> to vector<560x64xbf16>
    %c0_18 = arith.constant 0 : index
    %c0_19 = arith.constant 0 : index
    %26 = vector.load %arg8[%c0_18, %c0_19] : memref<64x128xbf16, #tpu.memory_space<vmem>>, vector<64x128xbf16>
    %cst_20 = arith.constant dense<0.000000e+00> : vector<560x128xf32>
    %27 = tpu.matmul %25, %26, %cst_20 {dimension_numbers = #tpu.dot_dimension_numbers<[1], [0], [0], [1], [0, 0, 1, 1], [], []>} : vector<560x64xbf16>, vector<64x128xbf16>, vector<560x128xf32> -> vector<560x128xf32>
    %c0_21 = arith.constant 0 : index
    %c0_22 = arith.constant 0 : index
    %28 = vector.load %arg9[%c0_21, %c0_22] : memref<1x128xf32, #tpu.memory_space<vmem>>, vector<1x128xf32>
    %29 = vector.broadcast %28 : vector<1x128xf32> to vector<560x128xf32>
    %30 = arith.addf %27, %29 : vector<560x128xf32>
    %cst_23 = arith.constant 0.000000e+00 : f32
    %31 = vector.broadcast %cst_23 : f32 to vector<560x128xf32>
    %32 = arith.maximumf %30, %31 : vector<560x128xf32>
    %33 = arith.truncf %32 : vector<560x128xf32> to vector<560x128xbf16>
    %c0_24 = arith.constant 0 : index
    %c0_25 = arith.constant 0 : index
    %34 = vector.load %arg10[%c0_24, %c0_25] : memref<128x128xbf16, #tpu.memory_space<vmem>>, vector<128x128xbf16>
    %cst_26 = arith.constant dense<0.000000e+00> : vector<560x128xf32>
    %35 = tpu.matmul %33, %34, %cst_26 {dimension_numbers = #tpu.dot_dimension_numbers<[1], [0], [0], [1], [0, 0, 1, 1], [], []>} : vector<560x128xbf16>, vector<128x128xbf16>, vector<560x128xf32> -> vector<560x128xf32>
    %c0_27 = arith.constant 0 : index
    %c0_28 = arith.constant 0 : index
    %36 = vector.load %arg11[%c0_27, %c0_28] : memref<1x128xf32, #tpu.memory_space<vmem>>, vector<1x128xf32>
    %37 = vector.broadcast %36 : vector<1x128xf32> to vector<560x128xf32>
    %38 = arith.addf %35, %37 : vector<560x128xf32>
    %c0_29 = arith.constant 0 : index
    %c0_30 = arith.constant 0 : index
    %39 = vector.load %arg12[%c0_29, %c0_30] : memref<560x128xf32, #tpu.memory_space<vmem>>, vector<560x128xf32>
    tpu.vector_store %arg12[%c0_29, %c0_30], %38 {strides = array<i32>} : memref<560x128xf32, #tpu.memory_space<vmem>>, vector<560x128xf32>,
    return
  }
  func.func @transform_0(%arg0: i32) -> (i32, i32) {
    %c0_i32 = arith.constant 0 : i32
    %c0_i32_0 = arith.constant 0 : i32
    return %arg0, %c0_i32 : i32, i32
  }
  func.func @transform_1(%arg0: i32) -> (i32, i32) {
    %c0_i32 = arith.constant 0 : i32
    %c0_i32_0 = arith.constant 0 : i32
    %c0_i32_1 = arith.constant 0 : i32
    return %c0_i32, %c0_i32_0 : i32, i32
  }
  func.func @transform_2(%arg0: i32) -> (i32, i32) {
    %c0_i32 = arith.constant 0 : i32
    %c0_i32_0 = arith.constant 0 : i32
    %c0_i32_1 = arith.constant 0 : i32
    return %c0_i32, %c0_i32_0 : i32, i32
  }
  func.func @transform_3(%arg0: i32) -> (i32, i32) {
    %c0_i32 = arith.constant 0 : i32
    %c0_i32_0 = arith.constant 0 : i32
    %c0_i32_1 = arith.constant 0 : i32
    return %c0_i32, %c0_i32_0 : i32, i32
  }
  func.func @transform_4(%arg0: i32) -> (i32, i32) {
    %c0_i32 = arith.constant 0 : i32
    %c0_i32_0 = arith.constant 0 : i32
    %c0_i32_1 = arith.constant 0 : i32
    return %c0_i32, %c0_i32_0 : i32, i32
  }
  func.func @transform_5(%arg0: i32) -> (i32, i32) {
    %c0_i32 = arith.constant 0 : i32
    %c0_i32_0 = arith.constant 0 : i32
    %c0_i32_1 = arith.constant 0 : i32
    return %c0_i32, %c0_i32_0 : i32, i32
  }
  func.func @transform_6(%arg0: i32) -> (i32, i32) {
    %c0_i32 = arith.constant 0 : i32
    %c0_i32_0 = arith.constant 0 : i32
    %c0_i32_1 = arith.constant 0 : i32
    return %c0_i32, %c0_i32_0 : i32, i32
  }
  func.func @transform_7(%arg0: i32) -> (i32, i32) {
    %c0_i32 = arith.constant 0 : i32
    %c0_i32_0 = arith.constant 0 : i32
    %c0_i32_1 = arith.constant 0 : i32
    return %c0_i32, %c0_i32_0 : i32, i32
  }
  func.func @transform_8(%arg0: i32) -> (i32, i32) {
    %c0_i32 = arith.constant 0 : i32
    %c0_i32_0 = arith.constant 0 : i32
    %c0_i32_1 = arith.constant 0 : i32
    return %c0_i32, %c0_i32_0 : i32, i32
  }
  func.func @transform_9(%arg0: i32) -> (i32, i32) {
    %c0_i32 = arith.constant 0 : i32
    %c0_i32_0 = arith.constant 0 : i32
    %c0_i32_1 = arith.constant 0 : i32
    return %c0_i32, %c0_i32_0 : i32, i32
  }
  func.func @transform_10(%arg0: i32) -> (i32, i32) {
    %c0_i32 = arith.constant 0 : i32
    %c0_i32_0 = arith.constant 0 : i32
    %c0_i32_1 = arith.constant 0 : i32
    return %c0_i32, %c0_i32_0 : i32, i32
  }
  func.func @transform_11(%arg0: i32) -> (i32, i32) {
    %c0_i32 = arith.constant 0 : i32
    %c0_i32_0 = arith.constant 0 : i32
    return %arg0, %c0_i32 : i32, i32
  }
}

</mosaic_0001>

<llo_original>
// kernel: autoencoder_forward.1
$region0: #{autoencoder_forward.1}
  #allocation0 [shape = 'u32[]', space=smem, size = 0x4, offset = 0x4, fixed_abs, tag = 'smem constant byte address 0x4 - core index']
  #allocation1 [shape = 'u32[144,128]{1,0:T(1,128)}', space=vmem, size = 0x12000, scoped, tag = 'internal scratch']
  %s0 = inlined_call_operand.vmem [shape: f32[560,128], index: 0, kind: input, shape index: {}]
  %s1 = inlined_call_operand.vmem [shape: bf16[128,128], index: 1, kind: input, shape index: {}]
  %s2 = inlined_call_operand.vmem [shape: f32[1,128], index: 2, kind: input, shape index: {}]
  %s3 = inlined_call_operand.vmem [shape: bf16[128,64], index: 3, kind: input, shape index: {}]
  %s4 = inlined_call_operand.vmem [shape: f32[1,64], index: 4, kind: input, shape index: {}]
  %s5 = inlined_call_operand.vmem [shape: bf16[64,64], index: 5, kind: input, shape index: {}]
  %s6 = inlined_call_operand.vmem [shape: f32[1,64], index: 6, kind: input, shape index: {}]
  %s7 = inlined_call_operand.vmem [shape: bf16[64,128], index: 7, kind: input, shape index: {}]
  %s8 = inlined_call_operand.vmem [shape: f32[1,128], index: 8, kind: input, shape index: {}]
  %s9 = inlined_call_operand.vmem [shape: bf16[128,128], index: 9, kind: input, shape index: {}]
  %s10 = inlined_call_operand.vmem [shape: f32[1,128], index: 10, kind: input, shape index: {}]
  %s11 = inlined_call_operand.vmem [shape: f32[560,128], index: 11, kind: output, shape index: {}]
  %s12 = sld [smem:[#allocation0]]
  $region54: #{autoencoder_forward.1} parent=0
    _
  %s14 = ssub.s32 1, %s12
  %s15 = scalar_select 0, %s14, %s12
  // Predicated region
  $region2: #{autoencoder_forward.1} parent=0 // pred_check
    _
  $region3: #{autoencoder_forward.1} parent=0 // pred_check_branch
    %17 = sbr.rel (0) target = $region5
  $region4: #{autoencoder_forward.1} parent=0 // pred_region
    _
  $region5: #{autoencoder_forward.1} parent=0 // pred_fallthru
    _
  // Predicated region
  $region6: #{autoencoder_forward.1} parent=0 // pred_check
    _
  $region7: #{autoencoder_forward.1} parent=0 // pred_check_branch
    %19 = sbr.rel (0) target = $region9
  $region8: #{autoencoder_forward.1} parent=0 // pred_region
    _
  $region9: #{autoencoder_forward.1} parent=0 // pred_fallthru
    _
  // Predicated region
  $region10: #{autoencoder_forward.1} parent=0 // pred_check
    _
  $region11: #{autoencoder_forward.1} parent=0 // pred_check_branch
    %21 = sbr.rel (0) target = $region13
  $region12: #{autoencoder_forward.1} parent=0 // pred_region
    _
  $region13: #{autoencoder_forward.1} parent=0 // pred_fallthru
    _
  // Predicated region
  $region14: #{autoencoder_forward.1} parent=0 // pred_check
    _
  $region15: #{autoencoder_forward.1} parent=0 // pred_check_branch
    %23 = sbr.rel (0) target = $region17
  $region16: #{autoencoder_forward.1} parent=0 // pred_region
    _
  $region17: #{autoencoder_forward.1} parent=0 // pred_fallthru
    _
  // Predicated region
  $region18: #{autoencoder_forward.1} parent=0 // pred_check
    _
  $region19: #{autoencoder_forward.1} parent=0 // pred_check_branch
    %25 = sbr.rel (0) target = $region21
  $region20: #{autoencoder_forward.1} parent=0 // pred_region
    _
  $region21: #{autoencoder_forward.1} parent=0 // pred_fallthru
    _
  // Predicated region
  $region22: #{autoencoder_forward.1} parent=0 // pred_check
    _
  $region23: #{autoencoder_forward.1} parent=0 // pred_check_branch
    %27 = sbr.rel (0) target = $region25
  $region24: #{autoencoder_forward.1} parent=0 // pred_region
    _
  $region25: #{autoencoder_forward.1} parent=0 // pred_fallthru
    _
  // Predicated region
  $region26: #{autoencoder_forward.1} parent=0 // pred_check
    _
  $region27: #{autoencoder_forward.1} parent=0 // pred_check_branch
    %29 = sbr.rel (0) target = $region29
  $region28: #{autoencoder_forward.1} parent=0 // pred_region
    _
  $region29: #{autoencoder_forward.1} parent=0 // pred_fallthru
    _
  // Predicated region
  $region30: #{autoencoder_forward.1} parent=0 // pred_check
    _
  $region31: #{autoencoder_forward.1} parent=0 // pred_check_branch
    %31 = sbr.rel (0) target = $region33
  $region32: #{autoencoder_forward.1} parent=0 // pred_region
    _
  $region33: #{autoencoder_forward.1} parent=0 // pred_fallthru
    _
  // Predicated region
  $region34: #{autoencoder_forward.1} parent=0 // pred_check
    _
  $region35: #{autoencoder_forward.1} parent=0 // pred_check_branch
    %33 = sbr.rel (0) target = $region37
  $region36: #{autoencoder_forward.1} parent=0 // pred_region
    _
  $region37: #{autoencoder_forward.1} parent=0 // pred_fallthru
    _
  // Predicated region
  $region38: #{autoencoder_forward.1} parent=0 // pred_check
    _
  $region39: #{autoencoder_forward.1} parent=0 // pred_check_branch
    %35 = sbr.rel (0) target = $region41
  $region40: #{autoencoder_forward.1} parent=0 // pred_region
    _
  $region41: #{autoencoder_forward.1} parent=0 // pred_fallthru
    _
  // Predicated region
  $region42: #{autoencoder_forward.1} parent=0 // pred_check
    _
  $region43: #{autoencoder_forward.1} parent=0 // pred_check_branch
    %37 = sbr.rel (0) target = $region45
  $region44: #{autoencoder_forward.1} parent=0 // pred_region
    _
  $region45: #{autoencoder_forward.1} parent=0 // pred_fallthru
    _
  %v39 = vld [vmem:[%s0] sm:$0xff]
  %v40 = vld [vmem:[%s0 + $0x8] sm:$0xff]
  %v41 = vld [vmem:[%s0 + $0x10] sm:$0xff]
  %v42 = vld [vmem:[%s0 + $0x18] sm:$0xff]
  %v43 = vld [vmem:[%s0 + $0x20] sm:$0xff]
  %v44 = vld [vmem:[%s0 + $0x28] sm:$0xff]
  %v45 = vld [vmem:[%s0 + $0x30] sm:$0xff]
  %v46 = vld [vmem:[%s0 + $0x38] sm:$0xff]
  %v47 = vld [vmem:[%s0 + $0x40] sm:$0xff]
  %v48 = vld [vmem:[%s0 + $0x48] sm:$0xff]
  %v49 = vld [vmem:[%s0 + $0x50] sm:$0xff]
  %v50 = vld [vmem:[%s0 + $0x58] sm:$0xff]
  %v51 = vld [vmem:[%s0 + $0x60] sm:$0xff]
  %v52 = vld [vmem:[%s0 + $0x68] sm:$0xff]
  %v53 = vld [vmem:[%s0 + $0x70] sm:$0xff]
  %v54 = vld [vmem:[%s0 + $0x78] sm:$0xff]
  %v55 = vld [vmem:[%s0 + $0x80] sm:$0xff]
  %v56 = vld [vmem:[%s0 + $0x88] sm:$0xff]
  %v57 = vld [vmem:[%s0 + $0x90] sm:$0xff]
  %v58 = vld [vmem:[%s0 + $0x98] sm:$0xff]
  %v59 = vld [vmem:[%s0 + $0xa0] sm:$0xff]
  %v60 = vld [vmem:[%s0 + $0xa8] sm:$0xff]
  %v61 = vld [vmem:[%s0 + $0xb0] sm:$0xff]
  %v62 = vld [vmem:[%s0 + $0xb8] sm:$0xff]
  %v63 = vld [vmem:[%s0 + $0xc0] sm:$0xff]
  %v64 = vld [vmem:[%s0 + $0xc8] sm:$0xff]
  %v65 = vld [vmem:[%s0 + $0xd0] sm:$0xff]
  %v66 = vld [vmem:[%s0 + $0xd8] sm:$0xff]
  %v67 = vld [vmem:[%s0 + $0xe0] sm:$0xff]
  %v68 = vld [vmem:[%s0 + $0xe8] sm:$0xff]
  %v69 = vld [vmem:[%s0 + $0xf0] sm:$0xff]
  %v70 = vld [vmem:[%s0 + $0xf8] sm:$0xff]
  %v71 = vld [vmem:[%s0 + $0x100] sm:$0xff]
  %v72 = vld [vmem:[%s0 + $0x108] sm:$0xff]
  %v73 = vld [vmem:[%s0 + $0x110] sm:$0xff]
  %v74 = vld [vmem:[%s0 + $0x118] sm:$0xff]
  %v75 = vld [vmem:[%s0 + $0x120] sm:$0xff]
  %v76 = vld [vmem:[%s0 + $0x128] sm:$0xff]
  %v77 = vld [vmem:[%s0 + $0x130] sm:$0xff]
  %v78 = vld [vmem:[%s0 + $0x138] sm:$0xff]
  %v79 = vld [vmem:[%s0 + $0x140] sm:$0xff]
  %v80 = vld [vmem:[%s0 + $0x148] sm:$0xff]
  %v81 = vld [vmem:[%s0 + $0x150] sm:$0xff]
  %v82 = vld [vmem:[%s0 + $0x158] sm:$0xff]
  %v83 = vld [vmem:[%s0 + $0x160] sm:$0xff]
  %v84 = vld [vmem:[%s0 + $0x168] sm:$0xff]
  %v85 = vld [vmem:[%s0 + $0x170] sm:$0xff]
  %v86 = vld [vmem:[%s0 + $0x178] sm:$0xff]
  %v87 = vld [vmem:[%s0 + $0x180] sm:$0xff]
  %v88 = vld [vmem:[%s0 + $0x188] sm:$0xff]
  %v89 = vld [vmem:[%s0 + $0x190] sm:$0xff]
  %v90 = vld [vmem:[%s0 + $0x198] sm:$0xff]
  %v91 = vld [vmem:[%s0 + $0x1a0] sm:$0xff]
  %v92 = vld [vmem:[%s0 + $0x1a8] sm:$0xff]
  %v93 = vld [vmem:[%s0 + $0x1b0] sm:$0xff]
  %v94 = vld [vmem:[%s0 + $0x1b8] sm:$0xff]
  %v95 = vld [vmem:[%s0 + $0x1c0] sm:$0xff]
  %v96 = vld [vmem:[%s0 + $0x1c8] sm:$0xff]
  %v97 = vld [vmem:[%s0 + $0x1d0] sm:$0xff]
  %v98 = vld [vmem:[%s0 + $0x1d8] sm:$0xff]
  %v99 = vld [vmem:[%s0 + $0x1e0] sm:$0xff]
  %v100 = vld [vmem:[%s0 + $0x1e8] sm:$0xff]
  %v101 = vld [vmem:[%s0 + $0x1f0] sm:$0xff]
  %v102 = vld [vmem:[%s0 + $0x1f8] sm:$0xff]
  %v103 = vld [vmem:[%s0 + $0x200] sm:$0xff]
  %v104 = vld [vmem:[%s0 + $0x208] sm:$0xff]
  %v105 = vld [vmem:[%s0 + $0x210] sm:$0xff]
  %v106 = vld [vmem:[%s0 + $0x218] sm:$0xff]
  %v107 = vld [vmem:[%s0 + $0x220] sm:$0xff]
  %v108 = vld [vmem:[%s0 + $0x228] sm:$0xff]
  %v109 = vpack.c.bf16 %v40, %v39
  %v110 = vpack.c.bf16 %v42, %v41
  %v111 = vpack.c.bf16 %v44, %v43
  %v112 = vpack.c.bf16 %v46, %v45
  %v113 = vpack.c.bf16 %v48, %v47
  %v114 = vpack.c.bf16 %v50, %v49
  %v115 = vpack.c.bf16 %v52, %v51
  %v116 = vpack.c.bf16 %v54, %v53
  %v117 = vpack.c.bf16 %v56, %v55
  %v118 = vpack.c.bf16 %v58, %v57
  %v119 = vpack.c.bf16 %v60, %v59
  %v120 = vpack.c.bf16 %v62, %v61
  %v121 = vpack.c.bf16 %v64, %v63
  %v122 = vpack.c.bf16 %v66, %v65
  %v123 = vpack.c.bf16 %v68, %v67
  %v124 = vpack.c.bf16 %v70, %v69
  %v125 = vpack.c.bf16 %v72, %v71
  %v126 = vpack.c.bf16 %v74, %v73
  %v127 = vpack.c.bf16 %v76, %v75
  %v128 = vpack.c.bf16 %v78, %v77
  %v129 = vpack.c.bf16 %v80, %v79
  %v130 = vpack.c.bf16 %v82, %v81
  %v131 = vpack.c.bf16 %v84, %v83
  %v132 = vpack.c.bf16 %v86, %v85
  %v133 = vpack.c.bf16 %v88, %v87
  %v134 = vpack.c.bf16 %v90, %v89
  %v135 = vpack.c.bf16 %v92, %v91
  %v136 = vpack.c.bf16 %v94, %v93
  %v137 = vpack.c.bf16 %v96, %v95
  %v138 = vpack.c.bf16 %v98, %v97
  %v139 = vpack.c.bf16 %v100, %v99
  %v140 = vpack.c.bf16 %v102, %v101
  %v141 = vpack.c.bf16 %v104, %v103
  %v142 = vpack.c.bf16 %v106, %v105
  %v143 = vpack.c.bf16 %v108, %v107
  %v144 = vld [vmem:[%s1] sm:$0xf]
  %v145 = vld [vmem:[%s1 + $0x4] sm:$0xf]
  %v146 = vld [vmem:[%s1 + $0x8] sm:$0xf]
  %v147 = vld [vmem:[%s1 + $0xc] sm:$0xf]
  %v148 = vld [vmem:[%s1 + $0x10] sm:$0xf]
  %v149 = vld [vmem:[%s1 + $0x14] sm:$0xf]
  %v150 = vld [vmem:[%s1 + $0x18] sm:$0xf]
  %v151 = vld [vmem:[%s1 + $0x1c] sm:$0xf]
  %v152 = vld [vmem:[%s1 + $0x20] sm:$0xf]
  %v153 = vld [vmem:[%s1 + $0x24] sm:$0xf]
  %v154 = vld [vmem:[%s1 + $0x28] sm:$0xf]
  %v155 = vld [vmem:[%s1 + $0x2c] sm:$0xf]
  %v156 = vld [vmem:[%s1 + $0x30] sm:$0xf]
  %v157 = vld [vmem:[%s1 + $0x34] sm:$0xf]
  %v158 = vld [vmem:[%s1 + $0x38] sm:$0xf]
  %v159 = vld [vmem:[%s1 + $0x3c] sm:$0xf]
  %v160 = vld [vmem:[%s2] sm:$0x1]
  %v162 = vlaneseq
  %v163 = vshrl.u32 %v162, 7
  %v164 = vsub.s32 0, %v163
  %v165 = vrot.slane %v160, %v164
  %v183 = vunpack.c.l.b16 %v144
  %v184 = vunpack.c.l.b16 %v145
  %v185 = vunpack.c.l.b16 %v146
  %v186 = vunpack.c.l.b16 %v147
  %v187 = vunpack.c.l.b16 %v148
  %v188 = vunpack.c.l.b16 %v149
  %v189 = vunpack.c.l.b16 %v150
  %v190 = vunpack.c.l.b16 %v151
  %v191 = vunpack.c.l.b16 %v152
  %v192 = vunpack.c.l.b16 %v153
  %v193 = vunpack.c.l.b16 %v154
  %v194 = vunpack.c.l.b16 %v155
  %v195 = vunpack.c.l.b16 %v156
  %v196 = vunpack.c.l.b16 %v157
  %v197 = vunpack.c.l.b16 %v158
  %v198 = vunpack.c.l.b16 %v159
  %v199 = vpack.c.b16 %v184, %v183
  %v200 = vpack.c.b16 %v186, %v185
  %v201 = vpack.c.b16 %v188, %v187
  %v202 = vpack.c.b16 %v190, %v189
  %v203 = vpack.c.b16 %v192, %v191
  %v204 = vpack.c.b16 %v194, %v193
  %v205 = vpack.c.b16 %v196, %v195
  %v206 = vpack.c.b16 %v198, %v197
  %215 = vmatprep.subr.bf16.mxu0 0
  %216 = vmatpush1.bf16.msra.mxu0 %v199
  %217 = vmatprep.subr.bf16.mxu0 0
  %218 = vmatpush1.bf16.msra.mxu0 %v200
  %219 = vmatprep.subr.bf16.mxu0 0
  %220 = vmatpush1.bf16.msra.mxu0 %v201
  %221 = vmatprep.subr.bf16.mxu0 0
  %222 = vmatpush1.bf16.msra.mxu0 %v202
  %223 = vmatprep.subr.bf16.mxu0 0
  %224 = vmatpush1.bf16.msra.mxu0 %v203
  %225 = vmatprep.subr.bf16.mxu0 0
  %226 = vmatpush1.bf16.msra.mxu0 %v204
  %227 = vmatprep.subr.bf16.mxu0 0
  %228 = vmatpush1.bf16.msra.mxu0 %v205
  %229 = vmatprep.subr.bf16.mxu0 0
  %230 = vmatpush1.bf16.msra.mxu0 %v206
  %231 = vmatprep.subr.bf16.mxu0 0
  %232 = vmatpush1.bf16.msra.mxu0 0
  %233 = vmatprep.subr.bf16.mxu0 0
  %234 = vmatpush1.bf16.msra.mxu0 0
  %235 = vmatprep.subr.bf16.mxu0 0
  %236 = vmatpush1.bf16.msra.mxu0 0
  %237 = vmatprep.subr.bf16.mxu0 0
  %238 = vmatpush1.bf16.msra.mxu0 0
  %239 = vmatprep.subr.bf16.mxu0 0
  %240 = vmatpush1.bf16.msra.mxu0 0
  %241 = vmatprep.subr.bf16.mxu0 0
  %242 = vmatpush1.bf16.msra.mxu0 0
  %243 = vmatprep.subr.bf16.mxu0 0
  %244 = vmatpush1.bf16.msra.mxu0 0
  %245 = vmatprep.subr.bf16.mxu0 0
  %246 = vmatpush1.bf16.msra.mxu0 0
  %247 = vmatprep.mubr.bf16.mxu0 0
  %248 = vmatmul.mubr.bf16.gmra.mrb[0].mxu0 %v109
  %v249 = vpop.f32.mrb[0].mxu0
  %v250 = vadd.f32 %v165, %v249
  %v251 = vpop.f32.mrb[0].mxu0
  %v252 = vpop.f32.mrb[0].mxu0
  %v253 = vadd.f32 %v165, %v252
  %v254 = vpop.f32.mrb[0].mxu0
  %255 = vmatprep.mubr.bf16.mxu0 0
  %256 = vmatmul.mubr.bf16.gmra.mrb[0].mxu0 %v110
  %v257 = vpop.f32.mrb[0].mxu0
  %v258 = vadd.f32 %v165, %v257
  %v259 = vpop.f32.mrb[0].mxu0
  %v260 = vpop.f32.mrb[0].mxu0
  %v261 = vadd.f32 %v165, %v260
  %v262 = vpop.f32.mrb[0].mxu0
  %263 = vmatprep.mubr.bf16.mxu0 0
  %264 = vmatmul.mubr.bf16.gmra.mrb[0].mxu0 %v111
  %v265 = vpop.f32.mrb[0].mxu0
  %v266 = vadd.f32 %v165, %v265
  %v267 = vpop.f32.mrb[0].mxu0
  %v268 = vpop.f32.mrb[0].mxu0
  %v269 = vadd.f32 %v165, %v268
  %v270 = vpop.f32.mrb[0].mxu0
  %271 = vmatprep.mubr.bf16.mxu0 0
  %272 = vmatmul.mubr.bf16.gmra.mrb[0].mxu0 %v112
  %v273 = vpop.f32.mrb[0].mxu0
  %v274 = vadd.f32 %v165, %v273
  %v275 = vpop.f32.mrb[0].mxu0
  %v276 = vpop.f32.mrb[0].mxu0
  %v277 = vadd.f32 %v165, %v276
  %v278 = vpop.f32.mrb[0].mxu0
  %279 = vmatprep.mubr.bf16.mxu0 0
  %280 = vmatmul.mubr.bf16.gmra.mrb[0].mxu0 %v113
  %v281 = vpop.f32.mrb[0].mxu0
  %v282 = vadd.f32 %v165, %v281
  %v283 = vpop.f32.mrb[0].mxu0
  %v284 = vpop.f32.mrb[0].mxu0
  %v285 = vadd.f32 %v165, %v284
  %v286 = vpop.f32.mrb[0].mxu0
  %287 = vmatprep.mubr.bf16.mxu0 0
  %288 = vmatmul.mubr.bf16.gmra.mrb[0].mxu0 %v114
  %v289 = vpop.f32.mrb[0].mxu0
  %v290 = vadd.f32 %v165, %v289
  %v291 = vpop.f32.mrb[0].mxu0
  %v292 = vpop.f32.mrb[0].mxu0
  %v293 = vadd.f32 %v165, %v292
  %v294 = vpop.f32.mrb[0].mxu0
  %295 = vmatprep.mubr.bf16.mxu0 0
  %296 = vmatmul.mubr.bf16.gmra.mrb[0].mxu0 %v115
  %v297 = vpop.f32.mrb[0].mxu0
  %v298 = vadd.f32 %v165, %v297
  %v299 = vpop.f32.mrb[0].mxu0
  %v300 = vpop.f32.mrb[0].mxu0
  %v301 = vadd.f32 %v165, %v300
  %v302 = vpop.f32.mrb[0].mxu0
  %303 = vmatprep.mubr.bf16.mxu0 0
  %304 = vmatmul.mubr.bf16.gmra.mrb[0].mxu0 %v116
  %v305 = vpop.f32.mrb[0].mxu0
  %v306 = vadd.f32 %v165, %v305
  %v307 = vpop.f32.mrb[0].mxu0
  %v308 = vpop.f32.mrb[0].mxu0
  %v309 = vadd.f32 %v165, %v308
  %v310 = vpop.f32.mrb[0].mxu0
  %311 = vmatprep.mubr.bf16.mxu0 0
  %312 = vmatmul.mubr.bf16.gmra.mrb[0].mxu0 %v117
  %v313 = vpop.f32.mrb[0].mxu0
  %v314 = vadd.f32 %v165, %v313
  %v315 = vpop.f32.mrb[0].mxu0
  %v316 = vpop.f32.mrb[0].mxu0
  %v317 = vadd.f32 %v165, %v316
  %v318 = vpop.f32.mrb[0].mxu0
  %319 = vmatprep.mubr.bf16.mxu0 0
  %320 = vmatmul.mubr.bf16.gmra.mrb[0].mxu0 %v118
  %v321 = vpop.f32.mrb[0].mxu0
  %v322 = vadd.f32 %v165, %v321
  %v323 = vpop.f32.mrb[0].mxu0
  %v324 = vpop.f32.mrb[0].mxu0
  %v325 = vadd.f32 %v165, %v324
  %v326 = vpop.f32.mrb[0].mxu0
  %327 = vmatprep.mubr.bf16.mxu0 0
  %328 = vmatmul.mubr.bf16.gmra.mrb[0].mxu0 %v119
  %v329 = vpop.f32.mrb[0].mxu0
  %v330 = vadd.f32 %v165, %v329
  %v331 = vpop.f32.mrb[0].mxu0
  %v332 = vpop.f32.mrb[0].mxu0
  %v333 = vadd.f32 %v165, %v332
  %v334 = vpop.f32.mrb[0].mxu0
  %335 = vmatprep.mubr.bf16.mxu0 0
  %336 = vmatmul.mubr.bf16.gmra.mrb[0].mxu0 %v120
  %v337 = vpop.f32.mrb[0].mxu0
  %v338 = vadd.f32 %v165, %v337
  %v339 = vpop.f32.mrb[0].mxu0
  %v340 = vpop.f32.mrb[0].mxu0
  %v341 = vadd.f32 %v165, %v340
  %v342 = vpop.f32.mrb[0].mxu0
  %343 = vmatprep.mubr.bf16.mxu0 0
  %344 = vmatmul.mubr.bf16.gmra.mrb[0].mxu0 %v121
  %v345 = vpop.f32.mrb[0].mxu0
  %v346 = vadd.f32 %v165, %v345
  %v347 = vpop.f32.mrb[0].mxu0
  %v348 = vpop.f32.mrb[0].mxu0
  %v349 = vadd.f32 %v165, %v348
  %v350 = vpop.f32.mrb[0].mxu0
  %351 = vmatprep.mubr.bf16.mxu0 0
  %352 = vmatmul.mubr.bf16.gmra.mrb[0].mxu0 %v122
  %v353 = vpop.f32.mrb[0].mxu0
  %v354 = vadd.f32 %v165, %v353
  %v355 = vpop.f32.mrb[0].mxu0
  %v356 = vpop.f32.mrb[0].mxu0
  %v357 = vadd.f32 %v165, %v356
  %v358 = vpop.f32.mrb[0].mxu0
  %359 = vmatprep.mubr.bf16.mxu0 0
  %360 = vmatmul.mubr.bf16.gmra.mrb[0].mxu0 %v123
  %v361 = vpop.f32.mrb[0].mxu0
  %v362 = vadd.f32 %v165, %v361
  %v363 = vpop.f32.mrb[0].mxu0
  %v364 = vpop.f32.mrb[0].mxu0
  %v365 = vadd.f32 %v165, %v364
  %v366 = vpop.f32.mrb[0].mxu0
  %367 = vmatprep.mubr.bf16.mxu0 0
  %368 = vmatmul.mubr.bf16.gmra.mrb[0].mxu0 %v124
  %v369 = vpop.f32.mrb[0].mxu0
  %v370 = vadd.f32 %v165, %v369
  %v371 = vpop.f32.mrb[0].mxu0
  %v372 = vpop.f32.mrb[0].mxu0
  %v373 = vadd.f32 %v165, %v372
  %v374 = vpop.f32.mrb[0].mxu0
  %375 = vmatprep.mubr.bf16.mxu0 0
  %376 = vmatmul.mubr.bf16.gmra.mrb[0].mxu0 %v125
  %v377 = vpop.f32.mrb[0].mxu0
  %v378 = vadd.f32 %v165, %v377
  %v379 = vpop.f32.mrb[0].mxu0
  %v380 = vpop.f32.mrb[0].mxu0
  %v381 = vadd.f32 %v165, %v380
  %v382 = vpop.f32.mrb[0].mxu0
  %383 = vmatprep.mubr.bf16.mxu0 0
  %384 = vmatmul.mubr.bf16.gmra.mrb[0].mxu0 %v126
  %v385 = vpop.f32.mrb[0].mxu0
  %v386 = vadd.f32 %v165, %v385
  %v387 = vpop.f32.mrb[0].mxu0
  %v388 = vpop.f32.mrb[0].mxu0
  %v389 = vadd.f32 %v165, %v388
  %v390 = vpop.f32.mrb[0].mxu0
  %391 = vmatprep.mubr.bf16.mxu0 0
  %392 = vmatmul.mubr.bf16.gmra.mrb[0].mxu0 %v127
  %v393 = vpop.f32.mrb[0].mxu0
  %v394 = vadd.f32 %v165, %v393
  %v395 = vpop.f32.mrb[0].mxu0
  %v396 = vpop.f32.mrb[0].mxu0
  %v397 = vadd.f32 %v165, %v396
  %v398 = vpop.f32.mrb[0].mxu0
  %399 = vmatprep.mubr.bf16.mxu0 0
  %400 = vmatmul.mubr.bf16.gmra.mrb[0].mxu0 %v128
  %v401 = vpop.f32.mrb[0].mxu0
  %v402 = vadd.f32 %v165, %v401
  %v403 = vpop.f32.mrb[0].mxu0
  %v404 = vpop.f32.mrb[0].mxu0
  %v405 = vadd.f32 %v165, %v404
  %v406 = vpop.f32.mrb[0].mxu0
  %407 = vmatprep.mubr.bf16.mxu0 0
  %408 = vmatmul.mubr.bf16.gmra.mrb[0].mxu0 %v129
  %v409 = vpop.f32.mrb[0].mxu0
  %v410 = vadd.f32 %v165, %v409
  %v411 = vpop.f32.mrb[0].mxu0
  %v412 = vpop.f32.mrb[0].mxu0
  %v413 = vadd.f32 %v165, %v412
  %v414 = vpop.f32.mrb[0].mxu0
  %415 = vmatprep.mubr.bf16.mxu0 0
  %416 = vmatmul.mubr.bf16.gmra.mrb[0].mxu0 %v130
  %v417 = vpop.f32.mrb[0].mxu0
  %v418 = vadd.f32 %v165, %v417
  %v419 = vpop.f32.mrb[0].mxu0
  %v420 = vpop.f32.mrb[0].mxu0
  %v421 = vadd.f32 %v165, %v420
  %v422 = vpop.f32.mrb[0].mxu0
  %423 = vmatprep.mubr.bf16.mxu0 0
  %424 = vmatmul.mubr.bf16.gmra.mrb[0].mxu0 %v131
  %v425 = vpop.f32.mrb[0].mxu0
  %v426 = vadd.f32 %v165, %v425
  %v427 = vpop.f32.mrb[0].mxu0
  %v428 = vpop.f32.mrb[0].mxu0
  %v429 = vadd.f32 %v165, %v428
  %v430 = vpop.f32.mrb[0].mxu0
  %431 = vmatprep.mubr.bf16.mxu0 0
  %432 = vmatmul.mubr.bf16.gmra.mrb[0].mxu0 %v132
  %v433 = vpop.f32.mrb[0].mxu0
  %v434 = vadd.f32 %v165, %v433
  %v435 = vpop.f32.mrb[0].mxu0
  %v436 = vpop.f32.mrb[0].mxu0
  %v437 = vadd.f32 %v165, %v436
  %v438 = vpop.f32.mrb[0].mxu0
  %439 = vmatprep.mubr.bf16.mxu0 0
  %440 = vmatmul.mubr.bf16.gmra.mrb[0].mxu0 %v133
  %v441 = vpop.f32.mrb[0].mxu0
  %v442 = vadd.f32 %v165, %v441
  %v443 = vpop.f32.mrb[0].mxu0
  %v444 = vpop.f32.mrb[0].mxu0
  %v445 = vadd.f32 %v165, %v444
  %v446 = vpop.f32.mrb[0].mxu0
  %447 = vmatprep.mubr.bf16.mxu0 0
  %448 = vmatmul.mubr.bf16.gmra.mrb[0].mxu0 %v134
  %v449 = vpop.f32.mrb[0].mxu0
  %v450 = vadd.f32 %v165, %v449
  %v451 = vpop.f32.mrb[0].mxu0
  %v452 = vpop.f32.mrb[0].mxu0
  %v453 = vadd.f32 %v165, %v452
  %v454 = vpop.f32.mrb[0].mxu0
  %455 = vmatprep.mubr.bf16.mxu0 0
  %456 = vmatmul.mubr.bf16.gmra.mrb[0].mxu0 %v135
  %v457 = vpop.f32.mrb[0].mxu0
  %v458 = vadd.f32 %v165, %v457
  %v459 = vpop.f32.mrb[0].mxu0
  %v460 = vpop.f32.mrb[0].mxu0
  %v461 = vadd.f32 %v165, %v460
  %v462 = vpop.f32.mrb[0].mxu0
  %463 = vmatprep.mubr.bf16.mxu0 0
  %464 = vmatmul.mubr.bf16.gmra.mrb[0].mxu0 %v136
  %v465 = vpop.f32.mrb[0].mxu0
  %v466 = vadd.f32 %v165, %v465
  %v467 = vpop.f32.mrb[0].mxu0
  %v468 = vpop.f32.mrb[0].mxu0
  %v469 = vadd.f32 %v165, %v468
  %v470 = vpop.f32.mrb[0].mxu0
  %471 = vmatprep.mubr.bf16.mxu0 0
  %472 = vmatmul.mubr.bf16.gmra.mrb[0].mxu0 %v137
  %v473 = vpop.f32.mrb[0].mxu0
  %v474 = vadd.f32 %v165, %v473
  %v475 = vpop.f32.mrb[0].mxu0
  %v476 = vpop.f32.mrb[0].mxu0
  %v477 = vadd.f32 %v165, %v476
  %v478 = vpop.f32.mrb[0].mxu0
  %479 = vmatprep.mubr.bf16.mxu0 0
  %480 = vmatmul.mubr.bf16.gmra.mrb[0].mxu0 %v138
  %v481 = vpop.f32.mrb[0].mxu0
  %v482 = vadd.f32 %v165, %v481
  %v483 = vpop.f32.mrb[0].mxu0
  %v484 = vpop.f32.mrb[0].mxu0
  %v485 = vadd.f32 %v165, %v484
  %v486 = vpop.f32.mrb[0].mxu0
  %487 = vmatprep.mubr.bf16.mxu0 0
  %488 = vmatmul.mubr.bf16.gmra.mrb[0].mxu0 %v139
  %v489 = vpop.f32.mrb[0].mxu0
  %v490 = vadd.f32 %v165, %v489
  %v491 = vpop.f32.mrb[0].mxu0
  %v492 = vpop.f32.mrb[0].mxu0
  %v493 = vadd.f32 %v165, %v492
  %v494 = vpop.f32.mrb[0].mxu0
  %495 = vmatprep.mubr.bf16.mxu0 0
  %496 = vmatmul.mubr.bf16.gmra.mrb[0].mxu0 %v140
  %v497 = vpop.f32.mrb[0].mxu0
  %v498 = vadd.f32 %v165, %v497
  %v499 = vpop.f32.mrb[0].mxu0
  %v500 = vpop.f32.mrb[0].mxu0
  %v501 = vadd.f32 %v165, %v500
  %v502 = vpop.f32.mrb[0].mxu0
  %503 = vmatprep.mubr.bf16.mxu0 0
  %504 = vmatmul.mubr.bf16.gmra.mrb[0].mxu0 %v141
  %v505 = vpop.f32.mrb[0].mxu0
  %v506 = vadd.f32 %v165, %v505
  %v507 = vpop.f32.mrb[0].mxu0
  %v508 = vpop.f32.mrb[0].mxu0
  %v509 = vadd.f32 %v165, %v508
  %v510 = vpop.f32.mrb[0].mxu0
  %511 = vmatprep.mubr.bf16.mxu0 0
  %512 = vmatmul.mubr.bf16.gmra.mrb[0].mxu0 %v142
  %v513 = vpop.f32.mrb[0].mxu0
  %v514 = vadd.f32 %v165, %v513
  %v515 = vpop.f32.mrb[0].mxu0
  %v516 = vpop.f32.mrb[0].mxu0
  %v517 = vadd.f32 %v165, %v516
  %v518 = vpop.f32.mrb[0].mxu0
  %519 = vmatprep.mubr.bf16.mxu0 0
  %520 = vmatmul.mubr.bf16.gmra.mrb[0].mxu0 %v143
  %v521 = vpop.f32.mrb[0].mxu0
  %v522 = vadd.f32 %v165, %v521
  %v523 = vpop.f32.mrb[0].mxu0
  %v524 = vpop.f32.mrb[0].mxu0
  %v525 = vadd.f32 %v165, %v524
  %v526 = vpop.f32.mrb[0].mxu0
  %527 = vdwg.mxu0
  %v528 = vmax.f32 %v250, 0.0
  %v529 = vmax.f32 %v253, 0.0
  %v530 = vmax.f32 %v258, 0.0
  %v531 = vmax.f32 %v261, 0.0
  %v532 = vmax.f32 %v266, 0.0
  %v533 = vmax.f32 %v269, 0.0
  %v534 = vmax.f32 %v274, 0.0
  %v535 = vmax.f32 %v277, 0.0
  %v536 = vmax.f32 %v282, 0.0
  %v537 = vmax.f32 %v285, 0.0
  %v538 = vmax.f32 %v290, 0.0
  %v539 = vmax.f32 %v293, 0.0
  %v540 = vmax.f32 %v298, 0.0
  %v541 = vmax.f32 %v301, 0.0
  %v542 = vmax.f32 %v306, 0.0
  %v543 = vmax.f32 %v309, 0.0
  %v544 = vmax.f32 %v314, 0.0
  %v545 = vmax.f32 %v317, 0.0
  %v546 = vmax.f32 %v322, 0.0
  %v547 = vmax.f32 %v325, 0.0
  %v548 = vmax.f32 %v330, 0.0
  %v549 = vmax.f32 %v333, 0.0
  %v550 = vmax.f32 %v338, 0.0
  %v551 = vmax.f32 %v341, 0.0
  %v552 = vmax.f32 %v346, 0.0
  %v553 = vmax.f32 %v349, 0.0
  %v554 = vmax.f32 %v354, 0.0
  %v555 = vmax.f32 %v357, 0.0
  %v556 = vmax.f32 %v362, 0.0
  %v557 = vmax.f32 %v365, 0.0
  %v558 = vmax.f32 %v370, 0.0
  %v559 = vmax.f32 %v373, 0.0
  %v560 = vmax.f32 %v378, 0.0
  %v561 = vmax.f32 %v381, 0.0
  %v562 = vmax.f32 %v386, 0.0
  %v563 = vmax.f32 %v389, 0.0
  %v564 = vmax.f32 %v394, 0.0
  %v565 = vmax.f32 %v397, 0.0
  %v566 = vmax.f32 %v402, 0.0
  %v567 = vmax.f32 %v405, 0.0
  %v568 = vmax.f32 %v410, 0.0
  %v569 = vmax.f32 %v413, 0.0
  %v570 = vmax.f32 %v418, 0.0
  %v571 = vmax.f32 %v421, 0.0
  %v572 = vmax.f32 %v426, 0.0
  %v573 = vmax.f32 %v429, 0.0
  %v574 = vmax.f32 %v434, 0.0
  %v575 = vmax.f32 %v437, 0.0
  %v576 = vmax.f32 %v442, 0.0
  %v577 = vmax.f32 %v445, 0.0
  %v578 = vmax.f32 %v450, 0.0
  %v579 = vmax.f32 %v453, 0.0
  %v580 = vmax.f32 %v458, 0.0
  %v581 = vmax.f32 %v461, 0.0
  %v582 = vmax.f32 %v466, 0.0
  %v583 = vmax.f32 %v469, 0.0
  %v584 = vmax.f32 %v474, 0.0
  %v585 = vmax.f32 %v477, 0.0
  %v586 = vmax.f32 %v482, 0.0
  %v587 = vmax.f32 %v485, 0.0
  %v588 = vmax.f32 %v490, 0.0
  %v589 = vmax.f32 %v493, 0.0
  %v590 = vmax.f32 %v498, 0.0
  %v591 = vmax.f32 %v501, 0.0
  %v592 = vmax.f32 %v506, 0.0
  %v593 = vmax.f32 %v509, 0.0
  %v594 = vmax.f32 %v514, 0.0
  %v595 = vmax.f32 %v517, 0.0
  %v596 = vmax.f32 %v522, 0.0
  %v597 = vmax.f32 %v525, 0.0
  %v598 = vpack.c.bf16 %v529, %v528
  %v599 = vpack.c.bf16 %v531, %v530
  %v600 = vpack.c.bf16 %v533, %v532
  %v601 = vpack.c.bf16 %v535, %v534
  %v602 = vpack.c.bf16 %v537, %v536
  %v603 = vpack.c.bf16 %v539, %v538
  %v604 = vpack.c.bf16 %v541, %v540
  %v605 = vpack.c.bf16 %v543, %v542
  %v606 = vpack.c.bf16 %v545, %v544
  %v607 = vpack.c.bf16 %v547, %v546
  %v608 = vpack.c.bf16 %v549, %v548
  %v609 = vpack.c.bf16 %v551, %v550
  %v610 = vpack.c.bf16 %v553, %v552
  %v611 = vpack.c.bf16 %v555, %v554
  %v612 = vpack.c.bf16 %v557, %v556
  %v613 = vpack.c.bf16 %v559, %v558
  %v614 = vpack.c.bf16 %v561, %v560
  %v615 = vpack.c.bf16 %v563, %v562
  %v616 = vpack.c.bf16 %v565, %v564
  %v617 = vpack.c.bf16 %v567, %v566
  %v618 = vpack.c.bf16 %v569, %v568
  %v619 = vpack.c.bf16 %v571, %v570
  %v620 = vpack.c.bf16 %v573, %v572
  %v621 = vpack.c.bf16 %v575, %v574
  %v622 = vpack.c.bf16 %v577, %v576
  %v623 = vpack.c.bf16 %v579, %v578
  %v624 = vpack.c.bf16 %v581, %v580
  %v625 = vpack.c.bf16 %v583, %v582
  %v626 = vpack.c.bf16 %v585, %v584
  %v627 = vpack.c.bf16 %v587, %v586
  %v628 = vpack.c.bf16 %v589, %v588
  %v629 = vpack.c.bf16 %v591, %v590
  %v630 = vpack.c.bf16 %v593, %v592
  %v631 = vpack.c.bf16 %v595, %v594
  %v632 = vpack.c.bf16 %v597, %v596
  %v633 = vld [vmem:[%s3] sm:$0xf]
  %v634 = vld [vmem:[%s3 + $0x4] sm:$0xf]
  %v635 = vld [vmem:[%s3 + $0x8] sm:$0xf]
  %v636 = vld [vmem:[%s3 + $0xc] sm:$0xf]
  %v637 = vld [vmem:[%s3 + $0x10] sm:$0xf]
  %v638 = vld [vmem:[%s3 + $0x14] sm:$0xf]
  %v639 = vld [vmem:[%s3 + $0x18] sm:$0xf]
  %v640 = vld [vmem:[%s3 + $0x1c] sm:$0xf]
  %v641 = vld [vmem:[%s3 + $0x20] sm:$0xf]
  %v642 = vld [vmem:[%s3 + $0x24] sm:$0xf]
  %v643 = vld [vmem:[%s3 + $0x28] sm:$0xf]
  %v644 = vld [vmem:[%s3 + $0x2c] sm:$0xf]
  %v645 = vld [vmem:[%s3 + $0x30] sm:$0xf]
  %v646 = vld [vmem:[%s3 + $0x34] sm:$0xf]
  %v647 = vld [vmem:[%s3 + $0x38] sm:$0xf]
  %v648 = vld [vmem:[%s3 + $0x3c] sm:$0xf]
  %v649 = vld [vmem:[%s4] sm:$0x1]
  %v651 = vlaneseq
  %v652 = vshrl.u32 %v651, 7
  %v653 = vsub.s32 0, %v652
  %v654 = vrot.slane %v649, %v653
  %v672 = vunpack.c.l.b16 %v633
  %v673 = vunpack.c.l.b16 %v634
  %v674 = vunpack.c.l.b16 %v635
  %v675 = vunpack.c.l.b16 %v636
  %v676 = vunpack.c.l.b16 %v637
  %v677 = vunpack.c.l.b16 %v638
  %v678 = vunpack.c.l.b16 %v639
  %v679 = vunpack.c.l.b16 %v640
  %v680 = vunpack.c.l.b16 %v641
  %v681 = vunpack.c.l.b16 %v642
  %v682 = vunpack.c.l.b16 %v643
  %v683 = vunpack.c.l.b16 %v644
  %v684 = vunpack.c.l.b16 %v645
  %v685 = vunpack.c.l.b16 %v646
  %v686 = vunpack.c.l.b16 %v647
  %v687 = vunpack.c.l.b16 %v648
  %v688 = vpack.c.b16 %v673, %v672
  %v689 = vpack.c.b16 %v675, %v674
  %v690 = vpack.c.b16 %v677, %v676
  %v691 = vpack.c.b16 %v679, %v678
  %v692 = vpack.c.b16 %v681, %v680
  %v693 = vpack.c.b16 %v683, %v682
  %v694 = vpack.c.b16 %v685, %v684
  %v695 = vpack.c.b16 %v687, %v686
  %704 = vmatprep.subr.bf16.mxu0 0
  %705 = vmatpush1.bf16.msra.mxu0 %v688
  %706 = vmatprep.subr.bf16.mxu0 0
  %707 = vmatpush1.bf16.msra.mxu0 %v689
  %708 = vmatprep.subr.bf16.mxu0 0
  %709 = vmatpush1.bf16.msra.mxu0 %v690
  %710 = vmatprep.subr.bf16.mxu0 0
  %711 = vmatpush1.bf16.msra.mxu0 %v691
  %712 = vmatprep.subr.bf16.mxu0 0
  %713 = vmatpush1.bf16.msra.mxu0 %v692
  %714 = vmatprep.subr.bf16.mxu0 0
  %715 = vmatpush1.bf16.msra.mxu0 %v693
  %716 = vmatprep.subr.bf16.mxu0 0
  %717 = vmatpush1.bf16.msra.mxu0 %v694
  %718 = vmatprep.subr.bf16.mxu0 0
  %719 = vmatpush1.bf16.msra.mxu0 %v695
  %720 = vmatprep.subr.bf16.mxu0 0
  %721 = vmatpush1.bf16.msra.mxu0 0
  %722 = vmatprep.subr.bf16.mxu0 0
  %723 = vmatpush1.bf16.msra.mxu0 0
  %724 = vmatprep.subr.bf16.mxu0 0
  %725 = vmatpush1.bf16.msra.mxu0 0
  %726 = vmatprep.subr.bf16.mxu0 0
  %727 = vmatpush1.bf16.msra.mxu0 0
  %728 = vmatprep.subr.bf16.mxu0 0
  %729 = vmatpush1.bf16.msra.mxu0 0
  %730 = vmatprep.subr.bf16.mxu0 0
  %731 = vmatpush1.bf16.msra.mxu0 0
  %732 = vmatprep.subr.bf16.mxu0 0
  %733 = vmatpush1.bf16.msra.mxu0 0
  %734 = vmatprep.subr.bf16.mxu0 0
  %735 = vmatpush1.bf16.msra.mxu0 0
  %736 = vmatprep.mubr.bf16.mxu0 0
  %737 = vmatmul.mubr.bf16.gmra.mrb[0].mxu0 %v598
  %v738 = vpop.f32.mrb[0].mxu0
  %v739 = vadd.f32 %v654, %v738
  %v740 = vpop.f32.mrb[0].mxu0
  %v741 = vpop.f32.mrb[0].mxu0
  %v742 = vadd.f32 %v654, %v741
  %v743 = vpop.f32.mrb[0].mxu0
  %744 = vmatprep.mubr.bf16.mxu0 0
  %745 = vmatmul.mubr.bf16.gmra.mrb[0].mxu0 %v599
  %v746 = vpop.f32.mrb[0].mxu0
  %v747 = vadd.f32 %v654, %v746
  %v748 = vpop.f32.mrb[0].mxu0
  %v749 = vpop.f32.mrb[0].mxu0
  %v750 = vadd.f32 %v654, %v749
  %v751 = vpop.f32.mrb[0].mxu0
  %752 = vmatprep.mubr.bf16.mxu0 0
  %753 = vmatmul.mubr.bf16.gmra.mrb[0].mxu0 %v600
  %v754 = vpop.f32.mrb[0].mxu0
  %v755 = vadd.f32 %v654, %v754
  %v756 = vpop.f32.mrb[0].mxu0
  %v757 = vpop.f32.mrb[0].mxu0
  %v758 = vadd.f32 %v654, %v757
  %v759 = vpop.f32.mrb[0].mxu0
  %760 = vmatprep.mubr.bf16.mxu0 0
  %761 = vmatmul.mubr.bf16.gmra.mrb[0].mxu0 %v601
  %v762 = vpop.f32.mrb[0].mxu0
  %v763 = vadd.f32 %v654, %v762
  %v764 = vpop.f32.mrb[0].mxu0
  %v765 = vpop.f32.mrb[0].mxu0
  %v766 = vadd.f32 %v654, %v765
  %v767 = vpop.f32.mrb[0].mxu0
  %768 = vmatprep.mubr.bf16.mxu0 0
  %769 = vmatmul.mubr.bf16.gmra.mrb[0].mxu0 %v602
  %v770 = vpop.f32.mrb[0].mxu0
  %v771 = vadd.f32 %v654, %v770
  %v772 = vpop.f32.mrb[0].mxu0
  %v773 = vpop.f32.mrb[0].mxu0
  %v774 = vadd.f32 %v654, %v773
  %v775 = vpop.f32.mrb[0].mxu0
  %776 = vmatprep.mubr.bf16.mxu0 0
  %777 = vmatmul.mubr.bf16.gmra.mrb[0].mxu0 %v603
  %v778 = vpop.f32.mrb[0].mxu0
  %v779 = vadd.f32 %v654, %v778
  %v780 = vpop.f32.mrb[0].mxu0
  %v781 = vpop.f32.mrb[0].mxu0
  %v782 = vadd.f32 %v654, %v781
  %v783 = vpop.f32.mrb[0].mxu0
  %784 = vmatprep.mubr.bf16.mxu0 0
  %785 = vmatmul.mubr.bf16.gmra.mrb[0].mxu0 %v604
  %v786 = vpop.f32.mrb[0].mxu0
  %v787 = vadd.f32 %v654, %v786
  %v788 = vpop.f32.mrb[0].mxu0
  %v789 = vpop.f32.mrb[0].mxu0
  %v790 = vadd.f32 %v654, %v789
  %v791 = vpop.f32.mrb[0].mxu0
  %792 = vmatprep.mubr.bf16.mxu0 0
  %793 = vmatmul.mubr.bf16.gmra.mrb[0].mxu0 %v605
  %v794 = vpop.f32.mrb[0].mxu0
  %v795 = vadd.f32 %v654, %v794
  %v796 = vpop.f32.mrb[0].mxu0
  %v797 = vpop.f32.mrb[0].mxu0
  %v798 = vadd.f32 %v654, %v797
  %v799 = vpop.f32.mrb[0].mxu0
  %800 = vmatprep.mubr.bf16.mxu0 0
  %801 = vmatmul.mubr.bf16.gmra.mrb[0].mxu0 %v606
  %v802 = vpop.f32.mrb[0].mxu0
  %v803 = vadd.f32 %v654, %v802
  %v804 = vpop.f32.mrb[0].mxu0
  %v805 = vpop.f32.mrb[0].mxu0
  %v806 = vadd.f32 %v654, %v805
  %v807 = vpop.f32.mrb[0].mxu0
  %808 = vmatprep.mubr.bf16.mxu0 0
  %809 = vmatmul.mubr.bf16.gmra.mrb[0].mxu0 %v607
  %v810 = vpop.f32.mrb[0].mxu0
  %v811 = vadd.f32 %v654, %v810
  %v812 = vpop.f32.mrb[0].mxu0
  %v813 = vpop.f32.mrb[0].mxu0
  %v814 = vadd.f32 %v654, %v813
  %v815 = vpop.f32.mrb[0].mxu0
  %816 = vmatprep.mubr.bf16.mxu0 0
  %817 = vmatmul.mubr.bf16.gmra.mrb[0].mxu0 %v608
  %v818 = vpop.f32.mrb[0].mxu0
  %v819 = vadd.f32 %v654, %v818
  %v820 = vpop.f32.mrb[0].mxu0
  %v821 = vpop.f32.mrb[0].mxu0
  %v822 = vadd.f32 %v654, %v821
  %v823 = vpop.f32.mrb[0].mxu0
  %824 = vmatprep.mubr.bf16.mxu0 0
  %825 = vmatmul.mubr.bf16.gmra.mrb[0].mxu0 %v609
  %v826 = vpop.f32.mrb[0].mxu0
  %v827 = vadd.f32 %v654, %v826
  %v828 = vpop.f32.mrb[0].mxu0
  %v829 = vpop.f32.mrb[0].mxu0
  %v830 = vadd.f32 %v654, %v829
  %v831 = vpop.f32.mrb[0].mxu0
  %832 = vmatprep.mubr.bf16.mxu0 0
  %833 = vmatmul.mubr.bf16.gmra.mrb[0].mxu0 %v610
  %v834 = vpop.f32.mrb[0].mxu0
  %v835 = vadd.f32 %v654, %v834
  %v836 = vpop.f32.mrb[0].mxu0
  %v837 = vpop.f32.mrb[0].mxu0
  %v838 = vadd.f32 %v654, %v837
  %v839 = vpop.f32.mrb[0].mxu0
  %840 = vmatprep.mubr.bf16.mxu0 0
  %841 = vmatmul.mubr.bf16.gmra.mrb[0].mxu0 %v611
  %v842 = vpop.f32.mrb[0].mxu0
  %v843 = vadd.f32 %v654, %v842
  %v844 = vpop.f32.mrb[0].mxu0
  %v845 = vpop.f32.mrb[0].mxu0
  %v846 = vadd.f32 %v654, %v845
  %v847 = vpop.f32.mrb[0].mxu0
  %848 = vmatprep.mubr.bf16.mxu0 0
  %849 = vmatmul.mubr.bf16.gmra.mrb[0].mxu0 %v612
  %v850 = vpop.f32.mrb[0].mxu0
  %v851 = vadd.f32 %v654, %v850
  %v852 = vpop.f32.mrb[0].mxu0
  %v853 = vpop.f32.mrb[0].mxu0
  %v854 = vadd.f32 %v654, %v853
  %v855 = vpop.f32.mrb[0].mxu0
  %856 = vmatprep.mubr.bf16.mxu0 0
  %857 = vmatmul.mubr.bf16.gmra.mrb[0].mxu0 %v613
  %v858 = vpop.f32.mrb[0].mxu0
  %v859 = vadd.f32 %v654, %v858
  %v860 = vpop.f32.mrb[0].mxu0
  %v861 = vpop.f32.mrb[0].mxu0
  %v862 = vadd.f32 %v654, %v861
  %v863 = vpop.f32.mrb[0].mxu0
  %864 = vmatprep.mubr.bf16.mxu0 0
  %865 = vmatmul.mubr.bf16.gmra.mrb[0].mxu0 %v614
  %v866 = vpop.f32.mrb[0].mxu0
  %v867 = vadd.f32 %v654, %v866
  %v868 = vpop.f32.mrb[0].mxu0
  %v869 = vpop.f32.mrb[0].mxu0
  %v870 = vadd.f32 %v654, %v869
  %v871 = vpop.f32.mrb[0].mxu0
  %872 = vmatprep.mubr.bf16.mxu0 0
  %873 = vmatmul.mubr.bf16.gmra.mrb[0].mxu0 %v615
  %v874 = vpop.f32.mrb[0].mxu0
  %v875 = vadd.f32 %v654, %v874
  %v876 = vpop.f32.mrb[0].mxu0
  %v877 = vpop.f32.mrb[0].mxu0
  %v878 = vadd.f32 %v654, %v877
  %v879 = vpop.f32.mrb[0].mxu0
  %880 = vmatprep.mubr.bf16.mxu0 0
  %881 = vmatmul.mubr.bf16.gmra.mrb[0].mxu0 %v616
  %v882 = vpop.f32.mrb[0].mxu0
  %v883 = vadd.f32 %v654, %v882
  %v884 = vpop.f32.mrb[0].mxu0
  %v885 = vpop.f32.mrb[0].mxu0
  %v886 = vadd.f32 %v654, %v885
  %v887 = vpop.f32.mrb[0].mxu0
  %888 = vmatprep.mubr.bf16.mxu0 0
  %889 = vmatmul.mubr.bf16.gmra.mrb[0].mxu0 %v617
  %v890 = vpop.f32.mrb[0].mxu0
  %v891 = vadd.f32 %v654, %v890
  %v892 = vpop.f32.mrb[0].mxu0
  %v893 = vpop.f32.mrb[0].mxu0
  %v894 = vadd.f32 %v654, %v893
  %v895 = vpop.f32.mrb[0].mxu0
  %896 = vmatprep.mubr.bf16.mxu0 0
  %897 = vmatmul.mubr.bf16.gmra.mrb[0].mxu0 %v618
  %v898 = vpop.f32.mrb[0].mxu0
  %v899 = vadd.f32 %v654, %v898
  %v900 = vpop.f32.mrb[0].mxu0
  %v901 = vpop.f32.mrb[0].mxu0
  %v902 = vadd.f32 %v654, %v901
  %v903 = vpop.f32.mrb[0].mxu0
  %904 = vmatprep.mubr.bf16.mxu0 0
  %905 = vmatmul.mubr.bf16.gmra.mrb[0].mxu0 %v619
  %v906 = vpop.f32.mrb[0].mxu0
  %v907 = vadd.f32 %v654, %v906
  %v908 = vpop.f32.mrb[0].mxu0
  %v909 = vpop.f32.mrb[0].mxu0
  %v910 = vadd.f32 %v654, %v909
  %v911 = vpop.f32.mrb[0].mxu0
  %912 = vmatprep.mubr.bf16.mxu0 0
  %913 = vmatmul.mubr.bf16.gmra.mrb[0].mxu0 %v620
  %v914 = vpop.f32.mrb[0].mxu0
  %v915 = vadd.f32 %v654, %v914
  %v916 = vpop.f32.mrb[0].mxu0
  %v917 = vpop.f32.mrb[0].mxu0
  %v918 = vadd.f32 %v654, %v917
  %v919 = vpop.f32.mrb[0].mxu0
  %920 = vmatprep.mubr.bf16.mxu0 0
  %921 = vmatmul.mubr.bf16.gmra.mrb[0].mxu0 %v621
  %v922 = vpop.f32.mrb[0].mxu0
  %v923 = vadd.f32 %v654, %v922
  %v924 = vpop.f32.mrb[0].mxu0
  %v925 = vpop.f32.mrb[0].mxu0
  %v926 = vadd.f32 %v654, %v925
  %v927 = vpop.f32.mrb[0].mxu0
  %928 = vmatprep.mubr.bf16.mxu0 0
  %929 = vmatmul.mubr.bf16.gmra.mrb[0].mxu0 %v622
  %v930 = vpop.f32.mrb[0].mxu0
  %v931 = vadd.f32 %v654, %v930
  %v932 = vpop.f32.mrb[0].mxu0
  %v933 = vpop.f32.mrb[0].mxu0
  %v934 = vadd.f32 %v654, %v933
  %v935 = vpop.f32.mrb[0].mxu0
  %936 = vmatprep.mubr.bf16.mxu0 0
  %937 = vmatmul.mubr.bf16.gmra.mrb[0].mxu0 %v623
  %v938 = vpop.f32.mrb[0].mxu0
  %v939 = vadd.f32 %v654, %v938
  %v940 = vpop.f32.mrb[0].mxu0
  %v941 = vpop.f32.mrb[0].mxu0
  %v942 = vadd.f32 %v654, %v941
  %v943 = vpop.f32.mrb[0].mxu0
  %944 = vmatprep.mubr.bf16.mxu0 0
  %945 = vmatmul.mubr.bf16.gmra.mrb[0].mxu0 %v624
  %v946 = vpop.f32.mrb[0].mxu0
  %v947 = vadd.f32 %v654, %v946
  %v948 = vpop.f32.mrb[0].mxu0
  %v949 = vpop.f32.mrb[0].mxu0
  %v950 = vadd.f32 %v654, %v949
  %v951 = vpop.f32.mrb[0].mxu0
  %952 = vmatprep.mubr.bf16.mxu0 0
  %953 = vmatmul.mubr.bf16.gmra.mrb[0].mxu0 %v625
  %v954 = vpop.f32.mrb[0].mxu0
  %v955 = vadd.f32 %v654, %v954
  %v956 = vpop.f32.mrb[0].mxu0
  %v957 = vpop.f32.mrb[0].mxu0
  %v958 = vadd.f32 %v654, %v957
  %v959 = vpop.f32.mrb[0].mxu0
  %960 = vmatprep.mubr.bf16.mxu0 0
  %961 = vmatmul.mubr.bf16.gmra.mrb[0].mxu0 %v626
  %v962 = vpop.f32.mrb[0].mxu0
  %v963 = vadd.f32 %v654, %v962
  %v964 = vpop.f32.mrb[0].mxu0
  %v965 = vpop.f32.mrb[0].mxu0
  %v966 = vadd.f32 %v654, %v965
  %v967 = vpop.f32.mrb[0].mxu0
  %968 = vmatprep.mubr.bf16.mxu0 0
  %969 = vmatmul.mubr.bf16.gmra.mrb[0].mxu0 %v627
  %v970 = vpop.f32.mrb[0].mxu0
  %v971 = vadd.f32 %v654, %v970
  %v972 = vpop.f32.mrb[0].mxu0
  %v973 = vpop.f32.mrb[0].mxu0
  %v974 = vadd.f32 %v654, %v973
  %v975 = vpop.f32.mrb[0].mxu0
  %976 = vmatprep.mubr.bf16.mxu0 0
  %977 = vmatmul.mubr.bf16.gmra.mrb[0].mxu0 %v628
  %v978 = vpop.f32.mrb[0].mxu0
  %v979 = vadd.f32 %v654, %v978
  %v980 = vpop.f32.mrb[0].mxu0
  %v981 = vpop.f32.mrb[0].mxu0
  %v982 = vadd.f32 %v654, %v981
  %v983 = vpop.f32.mrb[0].mxu0
  %984 = vmatprep.mubr.bf16.mxu0 0
  %985 = vmatmul.mubr.bf16.gmra.mrb[0].mxu0 %v629
  %v986 = vpop.f32.mrb[0].mxu0
  %v987 = vadd.f32 %v654, %v986
  %v988 = vpop.f32.mrb[0].mxu0
  %v989 = vpop.f32.mrb[0].mxu0
  %v990 = vadd.f32 %v654, %v989
  %v991 = vpop.f32.mrb[0].mxu0
  %992 = vmatprep.mubr.bf16.mxu0 0
  %993 = vmatmul.mubr.bf16.gmra.mrb[0].mxu0 %v630
  %v994 = vpop.f32.mrb[0].mxu0
  %v995 = vadd.f32 %v654, %v994
  %v996 = vpop.f32.mrb[0].mxu0
  %v997 = vpop.f32.mrb[0].mxu0
  %v998 = vadd.f32 %v654, %v997
  %v999 = vpop.f32.mrb[0].mxu0
  %1000 = vmatprep.mubr.bf16.mxu0 0
  %1001 = vmatmul.mubr.bf16.gmra.mrb[0].mxu0 %v631
  %v1002 = vpop.f32.mrb[0].mxu0
  %v1003 = vadd.f32 %v654, %v1002
  %v1004 = vpop.f32.mrb[0].mxu0
  %v1005 = vpop.f32.mrb[0].mxu0
  %v1006 = vadd.f32 %v654, %v1005
  %v1007 = vpop.f32.mrb[0].mxu0
  %1008 = vmatprep.mubr.bf16.mxu0 0
  %1009 = vmatmul.mubr.bf16.gmra.mrb[0].mxu0 %v632
  %v1010 = vpop.f32.mrb[0].mxu0
  %v1011 = vadd.f32 %v654, %v1010
  %v1012 = vpop.f32.mrb[0].mxu0
  %v1013 = vpop.f32.mrb[0].mxu0
  %v1014 = vadd.f32 %v654, %v1013
  %v1015 = vpop.f32.mrb[0].mxu0
  %1016 = vdwg.mxu0
  %v1017 = vmax.f32 %v739, 0.0
  %v1018 = vmax.f32 %v742, 0.0
  %v1019 = vmax.f32 %v747, 0.0
  %v1020 = vmax.f32 %v750, 0.0
  %v1021 = vmax.f32 %v755, 0.0
  %v1022 = vmax.f32 %v758, 0.0
  %v1023 = vmax.f32 %v763, 0.0
  %v1024 = vmax.f32 %v766, 0.0
  %v1025 = vmax.f32 %v771, 0.0
  %v1026 = vmax.f32 %v774, 0.0
  %v1027 = vmax.f32 %v779, 0.0
  %v1028 = vmax.f32 %v782, 0.0
  %v1029 = vmax.f32 %v787, 0.0
  %v1030 = vmax.f32 %v790, 0.0
  %v1031 = vmax.f32 %v795, 0.0
  %v1032 = vmax.f32 %v798, 0.0
  %v1033 = vmax.f32 %v803, 0.0
  %v1034 = vmax.f32 %v806, 0.0
  %v1035 = vmax.f32 %v811, 0.0
  %v1036 = vmax.f32 %v814, 0.0
  %v1037 = vmax.f32 %v819, 0.0
  %v1038 = vmax.f32 %v822, 0.0
  %v1039 = vmax.f32 %v827, 0.0
  %v1040 = vmax.f32 %v830, 0.0
  %v1041 = vmax.f32 %v835, 0.0
  %v1042 = vmax.f32 %v838, 0.0
  %v1043 = vmax.f32 %v843, 0.0
  %v1044 = vmax.f32 %v846, 0.0
  %v1045 = vmax.f32 %v851, 0.0
  %v1046 = vmax.f32 %v854, 0.0
  %v1047 = vmax.f32 %v859, 0.0
  %v1048 = vmax.f32 %v862, 0.0
  %v1049 = vmax.f32 %v867, 0.0
  %v1050 = vmax.f32 %v870, 0.0
  %v1051 = vmax.f32 %v875, 0.0
  %v1052 = vmax.f32 %v878, 0.0
  %v1053 = vmax.f32 %v883, 0.0
  %v1054 = vmax.f32 %v886, 0.0
  %v1055 = vmax.f32 %v891, 0.0
  %v1056 = vmax.f32 %v894, 0.0
  %v1057 = vmax.f32 %v899, 0.0
  %v1058 = vmax.f32 %v902, 0.0
  %v1059 = vmax.f32 %v907, 0.0
  %v1060 = vmax.f32 %v910, 0.0
  %v1061 = vmax.f32 %v915, 0.0
  %v1062 = vmax.f32 %v918, 0.0
  %v1063 = vmax.f32 %v923, 0.0
  %v1064 = vmax.f32 %v926, 0.0
  %v1065 = vmax.f32 %v931, 0.0
  %v1066 = vmax.f32 %v934, 0.0
  %v1067 = vmax.f32 %v939, 0.0
  %v1068 = vmax.f32 %v942, 0.0
  %v1069 = vmax.f32 %v947, 0.0
  %v1070 = vmax.f32 %v950, 0.0
  %v1071 = vmax.f32 %v955, 0.0
  %v1072 = vmax.f32 %v958, 0.0
  %v1073 = vmax.f32 %v963, 0.0
  %v1074 = vmax.f32 %v966, 0.0
  %v1075 = vmax.f32 %v971, 0.0
  %v1076 = vmax.f32 %v974, 0.0
  %v1077 = vmax.f32 %v979, 0.0
  %v1078 = vmax.f32 %v982, 0.0
  %v1079 = vmax.f32 %v987, 0.0
  %v1080 = vmax.f32 %v990, 0.0
  %v1081 = vmax.f32 %v995, 0.0
  %v1082 = vmax.f32 %v998, 0.0
  %v1083 = vmax.f32 %v1003, 0.0
  %v1084 = vmax.f32 %v1006, 0.0
  %v1085 = vmax.f32 %v1011, 0.0
  %v1086 = vmax.f32 %v1014, 0.0
  %v1087 = vpack.c.bf16 %v1018, %v1017
  %v1088 = vpack.c.bf16 %v1020, %v1019
  %v1089 = vpack.c.bf16 %v1022, %v1021
  %v1090 = vpack.c.bf16 %v1024, %v1023
  %v1091 = vpack.c.bf16 %v1026, %v1025
  %v1092 = vpack.c.bf16 %v1028, %v1027
  %v1093 = vpack.c.bf16 %v1030, %v1029
  %v1094 = vpack.c.bf16 %v1032, %v1031
  %v1095 = vpack.c.bf16 %v1034, %v1033
  %v1096 = vpack.c.bf16 %v1036, %v1035
  %v1097 = vpack.c.bf16 %v1038, %v1037
  %v1098 = vpack.c.bf16 %v1040, %v1039
  %v1099 = vpack.c.bf16 %v1042, %v1041
  %v1100 = vpack.c.bf16 %v1044, %v1043
  %v1101 = vpack.c.bf16 %v1046, %v1045
  %v1102 = vpack.c.bf16 %v1048, %v1047
  %v1103 = vpack.c.bf16 %v1050, %v1049
  %v1104 = vpack.c.bf16 %v1052, %v1051
  %v1105 = vpack.c.bf16 %v1054, %v1053
  %v1106 = vpack.c.bf16 %v1056, %v1055
  %v1107 = vpack.c.bf16 %v1058, %v1057
  %v1108 = vpack.c.bf16 %v1060, %v1059
  %v1109 = vpack.c.bf16 %v1062, %v1061
  %v1110 = vpack.c.bf16 %v1064, %v1063
  %v1111 = vpack.c.bf16 %v1066, %v1065
  %v1112 = vpack.c.bf16 %v1068, %v1067
  %v1113 = vpack.c.bf16 %v1070, %v1069
  %v1114 = vpack.c.bf16 %v1072, %v1071
  %v1115 = vpack.c.bf16 %v1074, %v1073
  %v1116 = vpack.c.bf16 %v1076, %v1075
  %v1117 = vpack.c.bf16 %v1078, %v1077
  %v1118 = vpack.c.bf16 %v1080, %v1079
  %v1119 = vpack.c.bf16 %v1082, %v1081
  %v1120 = vpack.c.bf16 %v1084, %v1083
  %v1121 = vpack.c.bf16 %v1086, %v1085
  %v1122 = vld [vmem:[%s5] sm:$0xf]
  %v1123 = vld [vmem:[%s5 + $0x4] sm:$0xf]
  %v1124 = vld [vmem:[%s5 + $0x8] sm:$0xf]
  %v1125 = vld [vmem:[%s5 + $0xc] sm:$0xf]
  %v1126 = vld [vmem:[%s5 + $0x10] sm:$0xf]
  %v1127 = vld [vmem:[%s5 + $0x14] sm:$0xf]
  %v1128 = vld [vmem:[%s5 + $0x18] sm:$0xf]
  %v1129 = vld [vmem:[%s5 + $0x1c] sm:$0xf]
  %v1130 = vld [vmem:[%s6] sm:$0x1]
  %v1132 = vlaneseq
  %v1133 = vshrl.u32 %v1132, 7
  %v1134 = vsub.s32 0, %v1133
  %v1135 = vrot.slane %v1130, %v1134
  %v1145 = vunpack.c.l.b16 %v1122
  %v1146 = vunpack.c.l.b16 %v1123
  %v1147 = vunpack.c.l.b16 %v1124
  %v1148 = vunpack.c.l.b16 %v1125
  %v1149 = vunpack.c.l.b16 %v1126
  %v1150 = vunpack.c.l.b16 %v1127
  %v1151 = vunpack.c.l.b16 %v1128
  %v1152 = vunpack.c.l.b16 %v1129
  %v1153 = vpack.c.b16 %v1146, %v1145
  %v1154 = vpack.c.b16 %v1148, %v1147
  %v1155 = vpack.c.b16 %v1150, %v1149
  %v1156 = vpack.c.b16 %v1152, %v1151
  %vm1161 = vcmask 523264
  %v1163 = vsel %vm1161, %v1087, 0
  %v1166 = vsel %vm1161, %v1088, 0
  %v1169 = vsel %vm1161, %v1089, 0
  %v1172 = vsel %vm1161, %v1090, 0
  %v1175 = vsel %vm1161, %v1091, 0
  %v1178 = vsel %vm1161, %v1092, 0
  %v1181 = vsel %vm1161, %v1093, 0
  %v1184 = vsel %vm1161, %v1094, 0
  %v1187 = vsel %vm1161, %v1095, 0
  %v1190 = vsel %vm1161, %v1096, 0
  %v1193 = vsel %vm1161, %v1097, 0
  %v1196 = vsel %vm1161, %v1098, 0
  %v1199 = vsel %vm1161, %v1099, 0
  %v1202 = vsel %vm1161, %v1100, 0
  %v1205 = vsel %vm1161, %v1101, 0
  %v1208 = vsel %vm1161, %v1102, 0
  %v1211 = vsel %vm1161, %v1103, 0
  %v1214 = vsel %vm1161, %v1104, 0
  %v1217 = vsel %vm1161, %v1105, 0
  %v1220 = vsel %vm1161, %v1106, 0
  %v1223 = vsel %vm1161, %v1107, 0
  %v1226 = vsel %vm1161, %v1108, 0
  %v1229 = vsel %vm1161, %v1109, 0
  %v1232 = vsel %vm1161, %v1110, 0
  %v1235 = vsel %vm1161, %v1111, 0
  %v1238 = vsel %vm1161, %v1112, 0
  %v1241 = vsel %vm1161, %v1113, 0
  %v1244 = vsel %vm1161, %v1114, 0
  %v1247 = vsel %vm1161, %v1115, 0
  %v1250 = vsel %vm1161, %v1116, 0
  %v1253 = vsel %vm1161, %v1117, 0
  %v1256 = vsel %vm1161, %v1118, 0
  %v1259 = vsel %vm1161, %v1119, 0
  %v1262 = vsel %vm1161, %v1120, 0
  %v1265 = vsel %vm1161, %v1121, 0
  %1267 = vmatprep.subr.bf16.mxu0 0
  %1268 = vmatpush1.bf16.msra.mxu0 %v1153
  %1269 = vmatprep.subr.bf16.mxu0 0
  %1270 = vmatpush1.bf16.msra.mxu0 %v1154
  %1271 = vmatprep.subr.bf16.mxu0 0
  %1272 = vmatpush1.bf16.msra.mxu0 %v1155
  %1273 = vmatprep.subr.bf16.mxu0 0
  %1274 = vmatpush1.bf16.msra.mxu0 %v1156
  %1275 = vmatprep.subr.bf16.mxu0 0
  %1276 = vmatpush1.bf16.msra.mxu0 0
  %1277 = vmatprep.subr.bf16.mxu0 0
  %1278 = vmatpush1.bf16.msra.mxu0 0
  %1279 = vmatprep.subr.bf16.mxu0 0
  %1280 = vmatpush1.bf16.msra.mxu0 0
  %1281 = vmatprep.subr.bf16.mxu0 0
  %1282 = vmatpush1.bf16.msra.mxu0 0
  %1283 = vmatprep.subr.bf16.mxu0 0
  %1284 = vmatpush1.bf16.msra.mxu0 0
  %1285 = vmatprep.subr.bf16.mxu0 0
  %1286 = vmatpush1.bf16.msra.mxu0 0
  %1287 = vmatprep.subr.bf16.mxu0 0
  %1288 = vmatpush1.bf16.msra.mxu0 0
  %1289 = vmatprep.subr.bf16.mxu0 0
  %1290 = vmatpush1.bf16.msra.mxu0 0
  %1291 = vmatprep.subr.bf16.mxu0 0
  %1292 = vmatpush1.bf16.msra.mxu0 0
  %1293 = vmatprep.subr.bf16.mxu0 0
  %1294 = vmatpush1.bf16.msra.mxu0 0
  %1295 = vmatprep.subr.bf16.mxu0 0
  %1296 = vmatpush1.bf16.msra.mxu0 0
  %1297 = vmatprep.subr.bf16.mxu0 0
  %1298 = vmatpush1.bf16.msra.mxu0 0
  %1299 = vmatprep.mubr.bf16.mxu0 0
  %1300 = vmatmul.mubr.bf16.gmra.mrb[0].mxu0 %v1163
  %v1301 = vpop.f32.mrb[0].mxu0
  %v1302 = vadd.f32 %v1135, %v1301
  %v1303 = vpop.f32.mrb[0].mxu0
  %v1304 = vpop.f32.mrb[0].mxu0
  %v1305 = vadd.f32 %v1135, %v1304
  %v1306 = vpop.f32.mrb[0].mxu0
  %1307 = vmatprep.mubr.bf16.mxu0 0
  %1308 = vmatmul.mubr.bf16.gmra.mrb[0].mxu0 %v1166
  %v1309 = vpop.f32.mrb[0].mxu0
  %v1310 = vadd.f32 %v1135, %v1309
  %v1311 = vpop.f32.mrb[0].mxu0
  %v1312 = vpop.f32.mrb[0].mxu0
  %v1313 = vadd.f32 %v1135, %v1312
  %v1314 = vpop.f32.mrb[0].mxu0
  %1315 = vmatprep.mubr.bf16.mxu0 0
  %1316 = vmatmul.mubr.bf16.gmra.mrb[0].mxu0 %v1169
  %v1317 = vpop.f32.mrb[0].mxu0
  %v1318 = vadd.f32 %v1135, %v1317
  %v1319 = vpop.f32.mrb[0].mxu0
  %v1320 = vpop.f32.mrb[0].mxu0
  %v1321 = vadd.f32 %v1135, %v1320
  %v1322 = vpop.f32.mrb[0].mxu0
  %1323 = vmatprep.mubr.bf16.mxu0 0
  %1324 = vmatmul.mubr.bf16.gmra.mrb[0].mxu0 %v1172
  %v1325 = vpop.f32.mrb[0].mxu0
  %v1326 = vadd.f32 %v1135, %v1325
  %v1327 = vpop.f32.mrb[0].mxu0
  %v1328 = vpop.f32.mrb[0].mxu0
  %v1329 = vadd.f32 %v1135, %v1328
  %v1330 = vpop.f32.mrb[0].mxu0
  %1331 = vmatprep.mubr.bf16.mxu0 0
  %1332 = vmatmul.mubr.bf16.gmra.mrb[0].mxu0 %v1175
  %v1333 = vpop.f32.mrb[0].mxu0
  %v1334 = vadd.f32 %v1135, %v1333
  %v1335 = vpop.f32.mrb[0].mxu0
  %v1336 = vpop.f32.mrb[0].mxu0
  %v1337 = vadd.f32 %v1135, %v1336
  %v1338 = vpop.f32.mrb[0].mxu0
  %1339 = vmatprep.mubr.bf16.mxu0 0
  %1340 = vmatmul.mubr.bf16.gmra.mrb[0].mxu0 %v1178
  %v1341 = vpop.f32.mrb[0].mxu0
  %v1342 = vadd.f32 %v1135, %v1341
  %v1343 = vpop.f32.mrb[0].mxu0
  %v1344 = vpop.f32.mrb[0].mxu0
  %v1345 = vadd.f32 %v1135, %v1344
  %v1346 = vpop.f32.mrb[0].mxu0
  %1347 = vmatprep.mubr.bf16.mxu0 0
  %1348 = vmatmul.mubr.bf16.gmra.mrb[0].mxu0 %v1181
  %v1349 = vpop.f32.mrb[0].mxu0
  %v1350 = vadd.f32 %v1135, %v1349
  %v1351 = vpop.f32.mrb[0].mxu0
  %v1352 = vpop.f32.mrb[0].mxu0
  %v1353 = vadd.f32 %v1135, %v1352
  %v1354 = vpop.f32.mrb[0].mxu0
  %1355 = vmatprep.mubr.bf16.mxu0 0
  %1356 = vmatmul.mubr.bf16.gmra.mrb[0].mxu0 %v1184
  %v1357 = vpop.f32.mrb[0].mxu0
  %v1358 = vadd.f32 %v1135, %v1357
  %v1359 = vpop.f32.mrb[0].mxu0
  %v1360 = vpop.f32.mrb[0].mxu0
  %v1361 = vadd.f32 %v1135, %v1360
  %v1362 = vpop.f32.mrb[0].mxu0
  %1363 = vmatprep.mubr.bf16.mxu0 0
  %1364 = vmatmul.mubr.bf16.gmra.mrb[0].mxu0 %v1187
  %v1365 = vpop.f32.mrb[0].mxu0
  %v1366 = vadd.f32 %v1135, %v1365
  %v1367 = vpop.f32.mrb[0].mxu0
  %v1368 = vpop.f32.mrb[0].mxu0
  %v1369 = vadd.f32 %v1135, %v1368
  %v1370 = vpop.f32.mrb[0].mxu0
  %1371 = vmatprep.mubr.bf16.mxu0 0
  %1372 = vmatmul.mubr.bf16.gmra.mrb[0].mxu0 %v1190
  %v1373 = vpop.f32.mrb[0].mxu0
  %v1374 = vadd.f32 %v1135, %v1373
  %v1375 = vpop.f32.mrb[0].mxu0
  %v1376 = vpop.f32.mrb[0].mxu0
  %v1377 = vadd.f32 %v1135, %v1376
  %v1378 = vpop.f32.mrb[0].mxu0
  %1379 = vmatprep.mubr.bf16.mxu0 0
  %1380 = vmatmul.mubr.bf16.gmra.mrb[0].mxu0 %v1193
  %v1381 = vpop.f32.mrb[0].mxu0
  %v1382 = vadd.f32 %v1135, %v1381
  %v1383 = vpop.f32.mrb[0].mxu0
  %v1384 = vpop.f32.mrb[0].mxu0
  %v1385 = vadd.f32 %v1135, %v1384
  %v1386 = vpop.f32.mrb[0].mxu0
  %1387 = vmatprep.mubr.bf16.mxu0 0
  %1388 = vmatmul.mubr.bf16.gmra.mrb[0].mxu0 %v1196
  %v1389 = vpop.f32.mrb[0].mxu0
  %v1390 = vadd.f32 %v1135, %v1389
  %v1391 = vpop.f32.mrb[0].mxu0
  %v1392 = vpop.f32.mrb[0].mxu0
  %v1393 = vadd.f32 %v1135, %v1392
  %v1394 = vpop.f32.mrb[0].mxu0
  %1395 = vmatprep.mubr.bf16.mxu0 0
  %1396 = vmatmul.mubr.bf16.gmra.mrb[0].mxu0 %v1199
  %v1397 = vpop.f32.mrb[0].mxu0
  %v1398 = vadd.f32 %v1135, %v1397
  %v1399 = vpop.f32.mrb[0].mxu0
  %v1400 = vpop.f32.mrb[0].mxu0
  %v1401 = vadd.f32 %v1135, %v1400
  %v1402 = vpop.f32.mrb[0].mxu0
  %1403 = vmatprep.mubr.bf16.mxu0 0
  %1404 = vmatmul.mubr.bf16.gmra.mrb[0].mxu0 %v1202
  %v1405 = vpop.f32.mrb[0].mxu0
  %v1406 = vadd.f32 %v1135, %v1405
  %v1407 = vpop.f32.mrb[0].mxu0
  %v1408 = vpop.f32.mrb[0].mxu0
  %v1409 = vadd.f32 %v1135, %v1408
  %v1410 = vpop.f32.mrb[0].mxu0
  %1411 = vmatprep.mubr.bf16.mxu0 0
  %1412 = vmatmul.mubr.bf16.gmra.mrb[0].mxu0 %v1205
  %v1413 = vpop.f32.mrb[0].mxu0
  %v1414 = vadd.f32 %v1135, %v1413
  %v1415 = vpop.f32.mrb[0].mxu0
  %v1416 = vpop.f32.mrb[0].mxu0
  %v1417 = vadd.f32 %v1135, %v1416
  %v1418 = vpop.f32.mrb[0].mxu0
  %1419 = vmatprep.mubr.bf16.mxu0 0
  %1420 = vmatmul.mubr.bf16.gmra.mrb[0].mxu0 %v1208
  %v1421 = vpop.f32.mrb[0].mxu0
  %v1422 = vadd.f32 %v1135, %v1421
  %v1423 = vpop.f32.mrb[0].mxu0
  %v1424 = vpop.f32.mrb[0].mxu0
  %v1425 = vadd.f32 %v1135, %v1424
  %v1426 = vpop.f32.mrb[0].mxu0
  %1427 = vmatprep.mubr.bf16.mxu0 0
  %1428 = vmatmul.mubr.bf16.gmra.mrb[0].mxu0 %v1211
  %v1429 = vpop.f32.mrb[0].mxu0
  %v1430 = vadd.f32 %v1135, %v1429
  %v1431 = vpop.f32.mrb[0].mxu0
  %v1432 = vpop.f32.mrb[0].mxu0
  %v1433 = vadd.f32 %v1135, %v1432
  %v1434 = vpop.f32.mrb[0].mxu0
  %1435 = vmatprep.mubr.bf16.mxu0 0
  %1436 = vmatmul.mubr.bf16.gmra.mrb[0].mxu0 %v1214
  %v1437 = vpop.f32.mrb[0].mxu0
  %v1438 = vadd.f32 %v1135, %v1437
  %v1439 = vpop.f32.mrb[0].mxu0
  %v1440 = vpop.f32.mrb[0].mxu0
  %v1441 = vadd.f32 %v1135, %v1440
  %v1442 = vpop.f32.mrb[0].mxu0
  %1443 = vmatprep.mubr.bf16.mxu0 0
  %1444 = vmatmul.mubr.bf16.gmra.mrb[0].mxu0 %v1217
  %v1445 = vpop.f32.mrb[0].mxu0
  %v1446 = vadd.f32 %v1135, %v1445
  %v1447 = vpop.f32.mrb[0].mxu0
  %v1448 = vpop.f32.mrb[0].mxu0
  %v1449 = vadd.f32 %v1135, %v1448
  %v1450 = vpop.f32.mrb[0].mxu0
  %1451 = vmatprep.mubr.bf16.mxu0 0
  %1452 = vmatmul.mubr.bf16.gmra.mrb[0].mxu0 %v1220
  %v1453 = vpop.f32.mrb[0].mxu0
  %v1454 = vadd.f32 %v1135, %v1453
  %v1455 = vpop.f32.mrb[0].mxu0
  %v1456 = vpop.f32.mrb[0].mxu0
  %v1457 = vadd.f32 %v1135, %v1456
  %v1458 = vpop.f32.mrb[0].mxu0
  %1459 = vmatprep.mubr.bf16.mxu0 0
  %1460 = vmatmul.mubr.bf16.gmra.mrb[0].mxu0 %v1223
  %v1461 = vpop.f32.mrb[0].mxu0
  %v1462 = vadd.f32 %v1135, %v1461
  %v1463 = vpop.f32.mrb[0].mxu0
  %v1464 = vpop.f32.mrb[0].mxu0
  %v1465 = vadd.f32 %v1135, %v1464
  %v1466 = vpop.f32.mrb[0].mxu0
  %1467 = vmatprep.mubr.bf16.mxu0 0
  %1468 = vmatmul.mubr.bf16.gmra.mrb[0].mxu0 %v1226
  %v1469 = vpop.f32.mrb[0].mxu0
  %v1470 = vadd.f32 %v1135, %v1469
  %v1471 = vpop.f32.mrb[0].mxu0
  %v1472 = vpop.f32.mrb[0].mxu0
  %v1473 = vadd.f32 %v1135, %v1472
  %v1474 = vpop.f32.mrb[0].mxu0
  %1475 = vmatprep.mubr.bf16.mxu0 0
  %1476 = vmatmul.mubr.bf16.gmra.mrb[0].mxu0 %v1229
  %v1477 = vpop.f32.mrb[0].mxu0
  %v1478 = vadd.f32 %v1135, %v1477
  %v1479 = vpop.f32.mrb[0].mxu0
  %v1480 = vpop.f32.mrb[0].mxu0
  %v1481 = vadd.f32 %v1135, %v1480
  %v1482 = vpop.f32.mrb[0].mxu0
  %1483 = vmatprep.mubr.bf16.mxu0 0
  %1484 = vmatmul.mubr.bf16.gmra.mrb[0].mxu0 %v1232
  %v1485 = vpop.f32.mrb[0].mxu0
  %v1486 = vadd.f32 %v1135, %v1485
  %v1487 = vpop.f32.mrb[0].mxu0
  %v1488 = vpop.f32.mrb[0].mxu0
  %v1489 = vadd.f32 %v1135, %v1488
  %v1490 = vpop.f32.mrb[0].mxu0
  %1491 = vmatprep.mubr.bf16.mxu0 0
  %1492 = vmatmul.mubr.bf16.gmra.mrb[0].mxu0 %v1235
  %v1493 = vpop.f32.mrb[0].mxu0
  %v1494 = vadd.f32 %v1135, %v1493
  %v1495 = vpop.f32.mrb[0].mxu0
  %v1496 = vpop.f32.mrb[0].mxu0
  %v1497 = vadd.f32 %v1135, %v1496
  %v1498 = vpop.f32.mrb[0].mxu0
  %1499 = vmatprep.mubr.bf16.mxu0 0
  %1500 = vmatmul.mubr.bf16.gmra.mrb[0].mxu0 %v1238
  %v1501 = vpop.f32.mrb[0].mxu0
  %v1502 = vadd.f32 %v1135, %v1501
  %v1503 = vpop.f32.mrb[0].mxu0
  %v1504 = vpop.f32.mrb[0].mxu0
  %v1505 = vadd.f32 %v1135, %v1504
  %v1506 = vpop.f32.mrb[0].mxu0
  %1507 = vmatprep.mubr.bf16.mxu0 0
  %1508 = vmatmul.mubr.bf16.gmra.mrb[0].mxu0 %v1241
  %v1509 = vpop.f32.mrb[0].mxu0
  %v1510 = vadd.f32 %v1135, %v1509
  %v1511 = vpop.f32.mrb[0].mxu0
  %v1512 = vpop.f32.mrb[0].mxu0
  %v1513 = vadd.f32 %v1135, %v1512
  %v1514 = vpop.f32.mrb[0].mxu0
  %1515 = vmatprep.mubr.bf16.mxu0 0
  %1516 = vmatmul.mubr.bf16.gmra.mrb[0].mxu0 %v1244
  %v1517 = vpop.f32.mrb[0].mxu0
  %v1518 = vadd.f32 %v1135, %v1517
  %v1519 = vpop.f32.mrb[0].mxu0
  %v1520 = vpop.f32.mrb[0].mxu0
  %v1521 = vadd.f32 %v1135, %v1520
  %v1522 = vpop.f32.mrb[0].mxu0
  %1523 = vmatprep.mubr.bf16.mxu0 0
  %1524 = vmatmul.mubr.bf16.gmra.mrb[0].mxu0 %v1247
  %v1525 = vpop.f32.mrb[0].mxu0
  %v1526 = vadd.f32 %v1135, %v1525
  %v1527 = vpop.f32.mrb[0].mxu0
  %v1528 = vpop.f32.mrb[0].mxu0
  %v1529 = vadd.f32 %v1135, %v1528
  %v1530 = vpop.f32.mrb[0].mxu0
  %1531 = vmatprep.mubr.bf16.mxu0 0
  %1532 = vmatmul.mubr.bf16.gmra.mrb[0].mxu0 %v1250
  %v1533 = vpop.f32.mrb[0].mxu0
  %v1534 = vadd.f32 %v1135, %v1533
  %v1535 = vpop.f32.mrb[0].mxu0
  %v1536 = vpop.f32.mrb[0].mxu0
  %v1537 = vadd.f32 %v1135, %v1536
  %v1538 = vpop.f32.mrb[0].mxu0
  %1539 = vmatprep.mubr.bf16.mxu0 0
  %1540 = vmatmul.mubr.bf16.gmra.mrb[0].mxu0 %v1253
  %v1541 = vpop.f32.mrb[0].mxu0
  %v1542 = vadd.f32 %v1135, %v1541
  %v1543 = vpop.f32.mrb[0].mxu0
  %v1544 = vpop.f32.mrb[0].mxu0
  %v1545 = vadd.f32 %v1135, %v1544
  %v1546 = vpop.f32.mrb[0].mxu0
  %1547 = vmatprep.mubr.bf16.mxu0 0
  %1548 = vmatmul.mubr.bf16.gmra.mrb[0].mxu0 %v1256
  %v1549 = vpop.f32.mrb[0].mxu0
  %v1550 = vadd.f32 %v1135, %v1549
  %v1551 = vpop.f32.mrb[0].mxu0
  %v1552 = vpop.f32.mrb[0].mxu0
  %v1553 = vadd.f32 %v1135, %v1552
  %v1554 = vpop.f32.mrb[0].mxu0
  %1555 = vmatprep.mubr.bf16.mxu0 0
  %1556 = vmatmul.mubr.bf16.gmra.mrb[0].mxu0 %v1259
  %v1557 = vpop.f32.mrb[0].mxu0
  %v1558 = vadd.f32 %v1135, %v1557
  %v1559 = vpop.f32.mrb[0].mxu0
  %v1560 = vpop.f32.mrb[0].mxu0
  %v1561 = vadd.f32 %v1135, %v1560
  %v1562 = vpop.f32.mrb[0].mxu0
  %1563 = vmatprep.mubr.bf16.mxu0 0
  %1564 = vmatmul.mubr.bf16.gmra.mrb[0].mxu0 %v1262
  %v1565 = vpop.f32.mrb[0].mxu0
  %v1566 = vadd.f32 %v1135, %v1565
  %v1567 = vpop.f32.mrb[0].mxu0
  %v1568 = vpop.f32.mrb[0].mxu0
  %v1569 = vadd.f32 %v1135, %v1568
  %v1570 = vpop.f32.mrb[0].mxu0
  %1571 = vmatprep.mubr.bf16.mxu0 0
  %1572 = vmatmul.mubr.bf16.gmra.mrb[0].mxu0 %v1265
  %v1573 = vpop.f32.mrb[0].mxu0
  %v1574 = vadd.f32 %v1135, %v1573
  %v1575 = vpop.f32.mrb[0].mxu0
  %v1576 = vpop.f32.mrb[0].mxu0
  %v1577 = vadd.f32 %v1135, %v1576
  %v1578 = vpop.f32.mrb[0].mxu0
  %1579 = vdwg.mxu0
  %v1580 = vmax.f32 %v1302, 0.0
  %v1581 = vmax.f32 %v1305, 0.0
  %v1582 = vmax.f32 %v1310, 0.0
  %v1583 = vmax.f32 %v1313, 0.0
  %v1584 = vmax.f32 %v1318, 0.0
  %v1585 = vmax.f32 %v1321, 0.0
  %v1586 = vmax.f32 %v1326, 0.0
  %v1587 = vmax.f32 %v1329, 0.0
  %v1588 = vmax.f32 %v1334, 0.0
  %v1589 = vmax.f32 %v1337, 0.0
  %v1590 = vmax.f32 %v1342, 0.0
  %v1591 = vmax.f32 %v1345, 0.0
  %v1592 = vmax.f32 %v1350, 0.0
  %v1593 = vmax.f32 %v1353, 0.0
  %v1594 = vmax.f32 %v1358, 0.0
  %v1595 = vmax.f32 %v1361, 0.0
  %v1596 = vmax.f32 %v1366, 0.0
  %v1597 = vmax.f32 %v1369, 0.0
  %v1598 = vmax.f32 %v1374, 0.0
  %v1599 = vmax.f32 %v1377, 0.0
  %v1600 = vmax.f32 %v1382, 0.0
  %v1601 = vmax.f32 %v1385, 0.0
  %v1602 = vmax.f32 %v1390, 0.0
  %v1603 = vmax.f32 %v1393, 0.0
  %v1604 = vmax.f32 %v1398, 0.0
  %v1605 = vmax.f32 %v1401, 0.0
  %v1606 = vmax.f32 %v1406, 0.0
  %v1607 = vmax.f32 %v1409, 0.0
  %v1608 = vmax.f32 %v1414, 0.0
  %v1609 = vmax.f32 %v1417, 0.0
  %v1610 = vmax.f32 %v1422, 0.0
  %v1611 = vmax.f32 %v1425, 0.0
  %v1612 = vmax.f32 %v1430, 0.0
  %v1613 = vmax.f32 %v1433, 0.0
  %v1614 = vmax.f32 %v1438, 0.0
  %v1615 = vmax.f32 %v1441, 0.0
  %v1616 = vmax.f32 %v1446, 0.0
  %v1617 = vmax.f32 %v1449, 0.0
  %v1618 = vmax.f32 %v1454, 0.0
  %v1619 = vmax.f32 %v1457, 0.0
  %v1620 = vmax.f32 %v1462, 0.0
  %v1621 = vmax.f32 %v1465, 0.0
  %v1622 = vmax.f32 %v1470, 0.0
  %v1623 = vmax.f32 %v1473, 0.0
  %v1624 = vmax.f32 %v1478, 0.0
  %v1625 = vmax.f32 %v1481, 0.0
  %v1626 = vmax.f32 %v1486, 0.0
  %v1627 = vmax.f32 %v1489, 0.0
  %v1628 = vmax.f32 %v1494, 0.0
  %v1629 = vmax.f32 %v1497, 0.0
  %v1630 = vmax.f32 %v1502, 0.0
  %v1631 = vmax.f32 %v1505, 0.0
  %v1632 = vmax.f32 %v1510, 0.0
  %v1633 = vmax.f32 %v1513, 0.0
  %v1634 = vmax.f32 %v1518, 0.0
  %v1635 = vmax.f32 %v1521, 0.0
  %v1636 = vmax.f32 %v1526, 0.0
  %v1637 = vmax.f32 %v1529, 0.0
  %v1638 = vmax.f32 %v1534, 0.0
  %v1639 = vmax.f32 %v1537, 0.0
  %v1640 = vmax.f32 %v1542, 0.0
  %v1641 = vmax.f32 %v1545, 0.0
  %v1642 = vmax.f32 %v1550, 0.0
  %v1643 = vmax.f32 %v1553, 0.0
  %v1644 = vmax.f32 %v1558, 0.0
  %v1645 = vmax.f32 %v1561, 0.0
  %v1646 = vmax.f32 %v1566, 0.0
  %v1647 = vmax.f32 %v1569, 0.0
  %v1648 = vmax.f32 %v1574, 0.0
  %v1649 = vmax.f32 %v1577, 0.0
  %v1650 = vpack.c.bf16 %v1581, %v1580
  %v1651 = vpack.c.bf16 %v1583, %v1582
  %v1652 = vpack.c.bf16 %v1585, %v1584
  %v1653 = vpack.c.bf16 %v1587, %v1586
  %v1654 = vpack.c.bf16 %v1589, %v1588
  %v1655 = vpack.c.bf16 %v1591, %v1590
  %v1656 = vpack.c.bf16 %v1593, %v1592
  %v1657 = vpack.c.bf16 %v1595, %v1594
  %v1658 = vpack.c.bf16 %v1597, %v1596
  %v1659 = vpack.c.bf16 %v1599, %v1598
  %v1660 = vpack.c.bf16 %v1601, %v1600
  %v1661 = vpack.c.bf16 %v1603, %v1602
  %v1662 = vpack.c.bf16 %v1605, %v1604
  %v1663 = vpack.c.bf16 %v1607, %v1606
  %v1664 = vpack.c.bf16 %v1609, %v1608
  %v1665 = vpack.c.bf16 %v1611, %v1610
  %v1666 = vpack.c.bf16 %v1613, %v1612
  %v1667 = vpack.c.bf16 %v1615, %v1614
  %v1668 = vpack.c.bf16 %v1617, %v1616
  %v1669 = vpack.c.bf16 %v1619, %v1618
  %v1670 = vpack.c.bf16 %v1621, %v1620
  %v1671 = vpack.c.bf16 %v1623, %v1622
  %v1672 = vpack.c.bf16 %v1625, %v1624
  %v1673 = vpack.c.bf16 %v1627, %v1626
  %v1674 = vpack.c.bf16 %v1629, %v1628
  %v1675 = vpack.c.bf16 %v1631, %v1630
  %v1676 = vpack.c.bf16 %v1633, %v1632
  %v1677 = vpack.c.bf16 %v1635, %v1634
  %v1678 = vpack.c.bf16 %v1637, %v1636
  %v1679 = vpack.c.bf16 %v1639, %v1638
  %v1680 = vpack.c.bf16 %v1641, %v1640
  %v1681 = vpack.c.bf16 %v1643, %v1642
  %v1682 = vpack.c.bf16 %v1645, %v1644
  %v1683 = vpack.c.bf16 %v1647, %v1646
  %v1684 = vpack.c.bf16 %v1649, %v1648
  %v1685 = vld [vmem:[%s7] sm:$0xf]
  %v1686 = vld [vmem:[%s7 + $0x4] sm:$0xf]
  %v1687 = vld [vmem:[%s7 + $0x8] sm:$0xf]
  %v1688 = vld [vmem:[%s7 + $0xc] sm:$0xf]
  %v1689 = vld [vmem:[%s7 + $0x10] sm:$0xf]
  %v1690 = vld [vmem:[%s7 + $0x14] sm:$0xf]
  %v1691 = vld [vmem:[%s7 + $0x18] sm:$0xf]
  %v1692 = vld [vmem:[%s7 + $0x1c] sm:$0xf]
  %v1693 = vld [vmem:[%s8] sm:$0x1]
  %v1695 = vlaneseq
  %v1696 = vshrl.u32 %v1695, 7
  %v1697 = vsub.s32 0, %v1696
  %v1698 = vrot.slane %v1693, %v1697
  %v1708 = vunpack.c.l.b16 %v1685
  %v1709 = vunpack.c.l.b16 %v1686
  %v1710 = vunpack.c.l.b16 %v1687
  %v1711 = vunpack.c.l.b16 %v1688
  %v1712 = vunpack.c.l.b16 %v1689
  %v1713 = vunpack.c.l.b16 %v1690
  %v1714 = vunpack.c.l.b16 %v1691
  %v1715 = vunpack.c.l.b16 %v1692
  %v1716 = vpack.c.b16 %v1709, %v1708
  %v1717 = vpack.c.b16 %v1711, %v1710
  %v1718 = vpack.c.b16 %v1713, %v1712
  %v1719 = vpack.c.b16 %v1715, %v1714
  %v1725 = vsel %vm1161, %v1650, 0
  %v1728 = vsel %vm1161, %v1651, 0
  %v1731 = vsel %vm1161, %v1652, 0
  %v1734 = vsel %vm1161, %v1653, 0
  %v1737 = vsel %vm1161, %v1654, 0
  %v1740 = vsel %vm1161, %v1655, 0
  %v1743 = vsel %vm1161, %v1656, 0
  %v1746 = vsel %vm1161, %v1657, 0
  %v1749 = vsel %vm1161, %v1658, 0
  %v1752 = vsel %vm1161, %v1659, 0
  %v1755 = vsel %vm1161, %v1660, 0
  %v1758 = vsel %vm1161, %v1661, 0
  %v1761 = vsel %vm1161, %v1662, 0
  %v1764 = vsel %vm1161, %v1663, 0
  %v1767 = vsel %vm1161, %v1664, 0
  %v1770 = vsel %vm1161, %v1665, 0
  %v1773 = vsel %vm1161, %v1666, 0
  %v1776 = vsel %vm1161, %v1667, 0
  %v1779 = vsel %vm1161, %v1668, 0
  %v1782 = vsel %vm1161, %v1669, 0
  %v1785 = vsel %vm1161, %v1670, 0
  %v1788 = vsel %vm1161, %v1671, 0
  %v1791 = vsel %vm1161, %v1672, 0
  %v1794 = vsel %vm1161, %v1673, 0
  %v1797 = vsel %vm1161, %v1674, 0
  %v1800 = vsel %vm1161, %v1675, 0
  %v1803 = vsel %vm1161, %v1676, 0
  %v1806 = vsel %vm1161, %v1677, 0
  %v1809 = vsel %vm1161, %v1678, 0
  %v1812 = vsel %vm1161, %v1679, 0
  %v1815 = vsel %vm1161, %v1680, 0
  %v1818 = vsel %vm1161, %v1681, 0
  %v1821 = vsel %vm1161, %v1682, 0
  %v1824 = vsel %vm1161, %v1683, 0
  %v1827 = vsel %vm1161, %v1684, 0
  %1829 = vmatprep.subr.bf16.mxu0 0
  %1830 = vmatpush1.bf16.msra.mxu0 %v1716
  %1831 = vmatprep.subr.bf16.mxu0 0
  %1832 = vmatpush1.bf16.msra.mxu0 %v1717
  %1833 = vmatprep.subr.bf16.mxu0 0
  %1834 = vmatpush1.bf16.msra.mxu0 %v1718
  %1835 = vmatprep.subr.bf16.mxu0 0
  %1836 = vmatpush1.bf16.msra.mxu0 %v1719
  %1837 = vmatprep.subr.bf16.mxu0 0
  %1838 = vmatpush1.bf16.msra.mxu0 0
  %1839 = vmatprep.subr.bf16.mxu0 0
  %1840 = vmatpush1.bf16.msra.mxu0 0
  %1841 = vmatprep.subr.bf16.mxu0 0
  %1842 = vmatpush1.bf16.msra.mxu0 0
  %1843 = vmatprep.subr.bf16.mxu0 0
  %1844 = vmatpush1.bf16.msra.mxu0 0
  %1845 = vmatprep.subr.bf16.mxu0 0
  %1846 = vmatpush1.bf16.msra.mxu0 0
  %1847 = vmatprep.subr.bf16.mxu0 0
  %1848 = vmatpush1.bf16.msra.mxu0 0
  %1849 = vmatprep.subr.bf16.mxu0 0
  %1850 = vmatpush1.bf16.msra.mxu0 0
  %1851 = vmatprep.subr.bf16.mxu0 0
  %1852 = vmatpush1.bf16.msra.mxu0 0
  %1853 = vmatprep.subr.bf16.mxu0 0
  %1854 = vmatpush1.bf16.msra.mxu0 0
  %1855 = vmatprep.subr.bf16.mxu0 0
  %1856 = vmatpush1.bf16.msra.mxu0 0
  %1857 = vmatprep.subr.bf16.mxu0 0
  %1858 = vmatpush1.bf16.msra.mxu0 0
  %1859 = vmatprep.subr.bf16.mxu0 0
  %1860 = vmatpush1.bf16.msra.mxu0 0
  %1861 = vmatprep.mubr.bf16.mxu0 0
  %1862 = vmatmul.mubr.bf16.gmra.mrb[0].mxu0 %v1725
  %v1863 = vpop.f32.mrb[0].mxu0
  %v1864 = vadd.f32 %v1698, %v1863
  %v1865 = vpop.f32.mrb[0].mxu0
  %v1866 = vpop.f32.mrb[0].mxu0
  %v1867 = vadd.f32 %v1698, %v1866
  %v1868 = vpop.f32.mrb[0].mxu0
  %1869 = vmatprep.mubr.bf16.mxu0 0
  %1870 = vmatmul.mubr.bf16.gmra.mrb[0].mxu0 %v1728
  %v1871 = vpop.f32.mrb[0].mxu0
  %v1872 = vadd.f32 %v1698, %v1871
  %v1873 = vpop.f32.mrb[0].mxu0
  %v1874 = vpop.f32.mrb[0].mxu0
  %v1875 = vadd.f32 %v1698, %v1874
  %v1876 = vpop.f32.mrb[0].mxu0
  %1877 = vmatprep.mubr.bf16.mxu0 0
  %1878 = vmatmul.mubr.bf16.gmra.mrb[0].mxu0 %v1731
  %v1879 = vpop.f32.mrb[0].mxu0
  %v1880 = vadd.f32 %v1698, %v1879
  %v1881 = vpop.f32.mrb[0].mxu0
  %v1882 = vpop.f32.mrb[0].mxu0
  %v1883 = vadd.f32 %v1698, %v1882
  %v1884 = vpop.f32.mrb[0].mxu0
  %1885 = vmatprep.mubr.bf16.mxu0 0
  %1886 = vmatmul.mubr.bf16.gmra.mrb[0].mxu0 %v1734
  %v1887 = vpop.f32.mrb[0].mxu0
  %v1888 = vadd.f32 %v1698, %v1887
  %v1889 = vpop.f32.mrb[0].mxu0
  %v1890 = vpop.f32.mrb[0].mxu0
  %v1891 = vadd.f32 %v1698, %v1890
  %v1892 = vpop.f32.mrb[0].mxu0
  %1893 = vmatprep.mubr.bf16.mxu0 0
  %1894 = vmatmul.mubr.bf16.gmra.mrb[0].mxu0 %v1737
  %v1895 = vpop.f32.mrb[0].mxu0
  %v1896 = vadd.f32 %v1698, %v1895
  %v1897 = vpop.f32.mrb[0].mxu0
  %v1898 = vpop.f32.mrb[0].mxu0
  %v1899 = vadd.f32 %v1698, %v1898
  %v1900 = vpop.f32.mrb[0].mxu0
  %1901 = vmatprep.mubr.bf16.mxu0 0
  %1902 = vmatmul.mubr.bf16.gmra.mrb[0].mxu0 %v1740
  %v1903 = vpop.f32.mrb[0].mxu0
  %v1904 = vadd.f32 %v1698, %v1903
  %v1905 = vpop.f32.mrb[0].mxu0
  %v1906 = vpop.f32.mrb[0].mxu0
  %v1907 = vadd.f32 %v1698, %v1906
  %v1908 = vpop.f32.mrb[0].mxu0
  %1909 = vmatprep.mubr.bf16.mxu0 0
  %1910 = vmatmul.mubr.bf16.gmra.mrb[0].mxu0 %v1743
  %v1911 = vpop.f32.mrb[0].mxu0
  %v1912 = vadd.f32 %v1698, %v1911
  %v1913 = vpop.f32.mrb[0].mxu0
  %v1914 = vpop.f32.mrb[0].mxu0
  %v1915 = vadd.f32 %v1698, %v1914
  %v1916 = vpop.f32.mrb[0].mxu0
  %1917 = vmatprep.mubr.bf16.mxu0 0
  %1918 = vmatmul.mubr.bf16.gmra.mrb[0].mxu0 %v1746
  %v1919 = vpop.f32.mrb[0].mxu0
  %v1920 = vadd.f32 %v1698, %v1919
  %v1921 = vpop.f32.mrb[0].mxu0
  %v1922 = vpop.f32.mrb[0].mxu0
  %v1923 = vadd.f32 %v1698, %v1922
  %v1924 = vpop.f32.mrb[0].mxu0
  %1925 = vmatprep.mubr.bf16.mxu0 0
  %1926 = vmatmul.mubr.bf16.gmra.mrb[0].mxu0 %v1749
  %v1927 = vpop.f32.mrb[0].mxu0
  %v1928 = vadd.f32 %v1698, %v1927
  %v1929 = vpop.f32.mrb[0].mxu0
  %v1930 = vpop.f32.mrb[0].mxu0
  %v1931 = vadd.f32 %v1698, %v1930
  %v1932 = vpop.f32.mrb[0].mxu0
  %1933 = vmatprep.mubr.bf16.mxu0 0
  %1934 = vmatmul.mubr.bf16.gmra.mrb[0].mxu0 %v1752
  %v1935 = vpop.f32.mrb[0].mxu0
  %v1936 = vadd.f32 %v1698, %v1935
  %v1937 = vpop.f32.mrb[0].mxu0
  %v1938 = vpop.f32.mrb[0].mxu0
  %v1939 = vadd.f32 %v1698, %v1938
  %v1940 = vpop.f32.mrb[0].mxu0
  %1941 = vmatprep.mubr.bf16.mxu0 0
  %1942 = vmatmul.mubr.bf16.gmra.mrb[0].mxu0 %v1755
  %v1943 = vpop.f32.mrb[0].mxu0
  %v1944 = vadd.f32 %v1698, %v1943
  %v1945 = vpop.f32.mrb[0].mxu0
  %v1946 = vpop.f32.mrb[0].mxu0
  %v1947 = vadd.f32 %v1698, %v1946
  %v1948 = vpop.f32.mrb[0].mxu0
  %1949 = vmatprep.mubr.bf16.mxu0 0
  %1950 = vmatmul.mubr.bf16.gmra.mrb[0].mxu0 %v1758
  %v1951 = vpop.f32.mrb[0].mxu0
  %v1952 = vadd.f32 %v1698, %v1951
  %v1953 = vpop.f32.mrb[0].mxu0
  %v1954 = vpop.f32.mrb[0].mxu0
  %v1955 = vadd.f32 %v1698, %v1954
  %v1956 = vpop.f32.mrb[0].mxu0
  %1957 = vmatprep.mubr.bf16.mxu0 0
  %1958 = vmatmul.mubr.bf16.gmra.mrb[0].mxu0 %v1761
  %v1959 = vpop.f32.mrb[0].mxu0
  %v1960 = vadd.f32 %v1698, %v1959
  %v1961 = vpop.f32.mrb[0].mxu0
  %v1962 = vpop.f32.mrb[0].mxu0
  %v1963 = vadd.f32 %v1698, %v1962
  %v1964 = vpop.f32.mrb[0].mxu0
  %1965 = vmatprep.mubr.bf16.mxu0 0
  %1966 = vmatmul.mubr.bf16.gmra.mrb[0].mxu0 %v1764
  %v1967 = vpop.f32.mrb[0].mxu0
  %v1968 = vadd.f32 %v1698, %v1967
  %v1969 = vpop.f32.mrb[0].mxu0
  %v1970 = vpop.f32.mrb[0].mxu0
  %v1971 = vadd.f32 %v1698, %v1970
  %v1972 = vpop.f32.mrb[0].mxu0
  %1973 = vmatprep.mubr.bf16.mxu0 0
  %1974 = vmatmul.mubr.bf16.gmra.mrb[0].mxu0 %v1767
  %v1975 = vpop.f32.mrb[0].mxu0
  %v1976 = vadd.f32 %v1698, %v1975
  %v1977 = vpop.f32.mrb[0].mxu0
  %v1978 = vpop.f32.mrb[0].mxu0
  %v1979 = vadd.f32 %v1698, %v1978
  %v1980 = vpop.f32.mrb[0].mxu0
  %1981 = vmatprep.mubr.bf16.mxu0 0
  %1982 = vmatmul.mubr.bf16.gmra.mrb[0].mxu0 %v1770
  %v1983 = vpop.f32.mrb[0].mxu0
  %v1984 = vadd.f32 %v1698, %v1983
  %v1985 = vpop.f32.mrb[0].mxu0
  %v1986 = vpop.f32.mrb[0].mxu0
  %v1987 = vadd.f32 %v1698, %v1986
  %v1988 = vpop.f32.mrb[0].mxu0
  %1989 = vmatprep.mubr.bf16.mxu0 0
  %1990 = vmatmul.mubr.bf16.gmra.mrb[0].mxu0 %v1773
  %v1991 = vpop.f32.mrb[0].mxu0
  %v1992 = vadd.f32 %v1698, %v1991
  %v1993 = vpop.f32.mrb[0].mxu0
  %v1994 = vpop.f32.mrb[0].mxu0
  %v1995 = vadd.f32 %v1698, %v1994
  %v1996 = vpop.f32.mrb[0].mxu0
  %1997 = vmatprep.mubr.bf16.mxu0 0
  %1998 = vmatmul.mubr.bf16.gmra.mrb[0].mxu0 %v1776
  %v1999 = vpop.f32.mrb[0].mxu0
  %v2000 = vadd.f32 %v1698, %v1999
  %v2001 = vpop.f32.mrb[0].mxu0
  %v2002 = vpop.f32.mrb[0].mxu0
  %v2003 = vadd.f32 %v1698, %v2002
  %v2004 = vpop.f32.mrb[0].mxu0
  %2005 = vmatprep.mubr.bf16.mxu0 0
  %2006 = vmatmul.mubr.bf16.gmra.mrb[0].mxu0 %v1779
  %v2007 = vpop.f32.mrb[0].mxu0
  %v2008 = vadd.f32 %v1698, %v2007
  %v2009 = vpop.f32.mrb[0].mxu0
  %v2010 = vpop.f32.mrb[0].mxu0
  %v2011 = vadd.f32 %v1698, %v2010
  %v2012 = vpop.f32.mrb[0].mxu0
  %2013 = vmatprep.mubr.bf16.mxu0 0
  %2014 = vmatmul.mubr.bf16.gmra.mrb[0].mxu0 %v1782
  %v2015 = vpop.f32.mrb[0].mxu0
  %v2016 = vadd.f32 %v1698, %v2015
  %v2017 = vpop.f32.mrb[0].mxu0
  %v2018 = vpop.f32.mrb[0].mxu0
  %v2019 = vadd.f32 %v1698, %v2018
  %v2020 = vpop.f32.mrb[0].mxu0
  %2021 = vmatprep.mubr.bf16.mxu0 0
  %2022 = vmatmul.mubr.bf16.gmra.mrb[0].mxu0 %v1785
  %v2023 = vpop.f32.mrb[0].mxu0
  %v2024 = vadd.f32 %v1698, %v2023
  %v2025 = vpop.f32.mrb[0].mxu0
  %v2026 = vpop.f32.mrb[0].mxu0
  %v2027 = vadd.f32 %v1698, %v2026
  %v2028 = vpop.f32.mrb[0].mxu0
  %2029 = vmatprep.mubr.bf16.mxu0 0
  %2030 = vmatmul.mubr.bf16.gmra.mrb[0].mxu0 %v1788
  %v2031 = vpop.f32.mrb[0].mxu0
  %v2032 = vadd.f32 %v1698, %v2031
  %v2033 = vpop.f32.mrb[0].mxu0
  %v2034 = vpop.f32.mrb[0].mxu0
  %v2035 = vadd.f32 %v1698, %v2034
  %v2036 = vpop.f32.mrb[0].mxu0
  %2037 = vmatprep.mubr.bf16.mxu0 0
  %2038 = vmatmul.mubr.bf16.gmra.mrb[0].mxu0 %v1791
  %v2039 = vpop.f32.mrb[0].mxu0
  %v2040 = vadd.f32 %v1698, %v2039
  %v2041 = vpop.f32.mrb[0].mxu0
  %v2042 = vpop.f32.mrb[0].mxu0
  %v2043 = vadd.f32 %v1698, %v2042
  %v2044 = vpop.f32.mrb[0].mxu0
  %2045 = vmatprep.mubr.bf16.mxu0 0
  %2046 = vmatmul.mubr.bf16.gmra.mrb[0].mxu0 %v1794
  %v2047 = vpop.f32.mrb[0].mxu0
  %v2048 = vadd.f32 %v1698, %v2047
  %v2049 = vpop.f32.mrb[0].mxu0
  %v2050 = vpop.f32.mrb[0].mxu0
  %v2051 = vadd.f32 %v1698, %v2050
  %v2052 = vpop.f32.mrb[0].mxu0
  %2053 = vmatprep.mubr.bf16.mxu0 0
  %2054 = vmatmul.mubr.bf16.gmra.mrb[0].mxu0 %v1797
  %v2055 = vpop.f32.mrb[0].mxu0
  %v2056 = vadd.f32 %v1698, %v2055
  %v2057 = vpop.f32.mrb[0].mxu0
  %v2058 = vpop.f32.mrb[0].mxu0
  %v2059 = vadd.f32 %v1698, %v2058
  %v2060 = vpop.f32.mrb[0].mxu0
  %2061 = vmatprep.mubr.bf16.mxu0 0
  %2062 = vmatmul.mubr.bf16.gmra.mrb[0].mxu0 %v1800
  %v2063 = vpop.f32.mrb[0].mxu0
  %v2064 = vadd.f32 %v1698, %v2063
  %v2065 = vpop.f32.mrb[0].mxu0
  %v2066 = vpop.f32.mrb[0].mxu0
  %v2067 = vadd.f32 %v1698, %v2066
  %v2068 = vpop.f32.mrb[0].mxu0
  %2069 = vmatprep.mubr.bf16.mxu0 0
  %2070 = vmatmul.mubr.bf16.gmra.mrb[0].mxu0 %v1803
  %v2071 = vpop.f32.mrb[0].mxu0
  %v2072 = vadd.f32 %v1698, %v2071
  %v2073 = vpop.f32.mrb[0].mxu0
  %v2074 = vpop.f32.mrb[0].mxu0
  %v2075 = vadd.f32 %v1698, %v2074
  %v2076 = vpop.f32.mrb[0].mxu0
  %2077 = vmatprep.mubr.bf16.mxu0 0
  %2078 = vmatmul.mubr.bf16.gmra.mrb[0].mxu0 %v1806
  %v2079 = vpop.f32.mrb[0].mxu0
  %v2080 = vadd.f32 %v1698, %v2079
  %v2081 = vpop.f32.mrb[0].mxu0
  %v2082 = vpop.f32.mrb[0].mxu0
  %v2083 = vadd.f32 %v1698, %v2082
  %v2084 = vpop.f32.mrb[0].mxu0
  %2085 = vmatprep.mubr.bf16.mxu0 0
  %2086 = vmatmul.mubr.bf16.gmra.mrb[0].mxu0 %v1809
  %v2087 = vpop.f32.mrb[0].mxu0
  %v2088 = vadd.f32 %v1698, %v2087
  %v2089 = vpop.f32.mrb[0].mxu0
  %v2090 = vpop.f32.mrb[0].mxu0
  %v2091 = vadd.f32 %v1698, %v2090
  %v2092 = vpop.f32.mrb[0].mxu0
  %2093 = vmatprep.mubr.bf16.mxu0 0
  %2094 = vmatmul.mubr.bf16.gmra.mrb[0].mxu0 %v1812
  %v2095 = vpop.f32.mrb[0].mxu0
  %v2096 = vadd.f32 %v1698, %v2095
  %v2097 = vpop.f32.mrb[0].mxu0
  %v2098 = vpop.f32.mrb[0].mxu0
  %v2099 = vadd.f32 %v1698, %v2098
  %v2100 = vpop.f32.mrb[0].mxu0
  %2101 = vmatprep.mubr.bf16.mxu0 0
  %2102 = vmatmul.mubr.bf16.gmra.mrb[0].mxu0 %v1815
  %v2103 = vpop.f32.mrb[0].mxu0
  %v2104 = vadd.f32 %v1698, %v2103
  %v2105 = vpop.f32.mrb[0].mxu0
  %v2106 = vpop.f32.mrb[0].mxu0
  %v2107 = vadd.f32 %v1698, %v2106
  %v2108 = vpop.f32.mrb[0].mxu0
  %2109 = vmatprep.mubr.bf16.mxu0 0
  %2110 = vmatmul.mubr.bf16.gmra.mrb[0].mxu0 %v1818
  %v2111 = vpop.f32.mrb[0].mxu0
  %v2112 = vadd.f32 %v1698, %v2111
  %v2113 = vpop.f32.mrb[0].mxu0
  %v2114 = vpop.f32.mrb[0].mxu0
  %v2115 = vadd.f32 %v1698, %v2114
  %v2116 = vpop.f32.mrb[0].mxu0
  %2117 = vmatprep.mubr.bf16.mxu0 0
  %2118 = vmatmul.mubr.bf16.gmra.mrb[0].mxu0 %v1821
  %v2119 = vpop.f32.mrb[0].mxu0
  %v2120 = vadd.f32 %v1698, %v2119
  %v2121 = vpop.f32.mrb[0].mxu0
  %v2122 = vpop.f32.mrb[0].mxu0
  %v2123 = vadd.f32 %v1698, %v2122
  %v2124 = vpop.f32.mrb[0].mxu0
  %2125 = vmatprep.mubr.bf16.mxu0 0
  %2126 = vmatmul.mubr.bf16.gmra.mrb[0].mxu0 %v1824
  %v2127 = vpop.f32.mrb[0].mxu0
  %v2128 = vadd.f32 %v1698, %v2127
  %v2129 = vpop.f32.mrb[0].mxu0
  %v2130 = vpop.f32.mrb[0].mxu0
  %v2131 = vadd.f32 %v1698, %v2130
  %v2132 = vpop.f32.mrb[0].mxu0
  %2133 = vmatprep.mubr.bf16.mxu0 0
  %2134 = vmatmul.mubr.bf16.gmra.mrb[0].mxu0 %v1827
  %v2135 = vpop.f32.mrb[0].mxu0
  %v2136 = vadd.f32 %v1698, %v2135
  %v2137 = vpop.f32.mrb[0].mxu0
  %v2138 = vpop.f32.mrb[0].mxu0
  %v2139 = vadd.f32 %v1698, %v2138
  %v2140 = vpop.f32.mrb[0].mxu0
  %2141 = vdwg.mxu0
  %v2142 = vmax.f32 %v1864, 0.0
  %v2143 = vmax.f32 %v1867, 0.0
  %v2144 = vmax.f32 %v1872, 0.0
  %v2145 = vmax.f32 %v1875, 0.0
  %v2146 = vmax.f32 %v1880, 0.0
  %v2147 = vmax.f32 %v1883, 0.0
  %v2148 = vmax.f32 %v1888, 0.0
  %v2149 = vmax.f32 %v1891, 0.0
  %v2150 = vmax.f32 %v1896, 0.0
  %v2151 = vmax.f32 %v1899, 0.0
  %v2152 = vmax.f32 %v1904, 0.0
  %v2153 = vmax.f32 %v1907, 0.0
  %v2154 = vmax.f32 %v1912, 0.0
  %v2155 = vmax.f32 %v1915, 0.0
  %v2156 = vmax.f32 %v1920, 0.0
  %v2157 = vmax.f32 %v1923, 0.0
  %v2158 = vmax.f32 %v1928, 0.0
  %v2159 = vmax.f32 %v1931, 0.0
  %v2160 = vmax.f32 %v1936, 0.0
  %v2161 = vmax.f32 %v1939, 0.0
  %v2162 = vmax.f32 %v1944, 0.0
  %v2163 = vmax.f32 %v1947, 0.0
  %v2164 = vmax.f32 %v1952, 0.0
  %v2165 = vmax.f32 %v1955, 0.0
  %v2166 = vmax.f32 %v1960, 0.0
  %v2167 = vmax.f32 %v1963, 0.0
  %v2168 = vmax.f32 %v1968, 0.0
  %v2169 = vmax.f32 %v1971, 0.0
  %v2170 = vmax.f32 %v1976, 0.0
  %v2171 = vmax.f32 %v1979, 0.0
  %v2172 = vmax.f32 %v1984, 0.0
  %v2173 = vmax.f32 %v1987, 0.0
  %v2174 = vmax.f32 %v1992, 0.0
  %v2175 = vmax.f32 %v1995, 0.0
  %v2176 = vmax.f32 %v2000, 0.0
  %v2177 = vmax.f32 %v2003, 0.0
  %v2178 = vmax.f32 %v2008, 0.0
  %v2179 = vmax.f32 %v2011, 0.0
  %v2180 = vmax.f32 %v2016, 0.0
  %v2181 = vmax.f32 %v2019, 0.0
  %v2182 = vmax.f32 %v2024, 0.0
  %v2183 = vmax.f32 %v2027, 0.0
  %v2184 = vmax.f32 %v2032, 0.0
  %v2185 = vmax.f32 %v2035, 0.0
  %v2186 = vmax.f32 %v2040, 0.0
  %v2187 = vmax.f32 %v2043, 0.0
  %v2188 = vmax.f32 %v2048, 0.0
  %v2189 = vmax.f32 %v2051, 0.0
  %v2190 = vmax.f32 %v2056, 0.0
  %v2191 = vmax.f32 %v2059, 0.0
  %v2192 = vmax.f32 %v2064, 0.0
  %v2193 = vmax.f32 %v2067, 0.0
  %v2194 = vmax.f32 %v2072, 0.0
  %v2195 = vmax.f32 %v2075, 0.0
  %v2196 = vmax.f32 %v2080, 0.0
  %v2197 = vmax.f32 %v2083, 0.0
  %v2198 = vmax.f32 %v2088, 0.0
  %v2199 = vmax.f32 %v2091, 0.0
  %v2200 = vmax.f32 %v2096, 0.0
  %v2201 = vmax.f32 %v2099, 0.0
  %v2202 = vmax.f32 %v2104, 0.0
  %v2203 = vmax.f32 %v2107, 0.0
  %v2204 = vmax.f32 %v2112, 0.0
  %v2205 = vmax.f32 %v2115, 0.0
  %v2206 = vmax.f32 %v2120, 0.0
  %v2207 = vmax.f32 %v2123, 0.0
  %v2208 = vmax.f32 %v2128, 0.0
  %v2209 = vmax.f32 %v2131, 0.0
  %v2210 = vmax.f32 %v2136, 0.0
  %v2211 = vmax.f32 %v2139, 0.0
  %v2212 = vpack.c.bf16 %v2143, %v2142
  %v2213 = vpack.c.bf16 %v2145, %v2144
  %v2214 = vpack.c.bf16 %v2147, %v2146
  %v2215 = vpack.c.bf16 %v2149, %v2148
  %v2216 = vpack.c.bf16 %v2151, %v2150
  %v2217 = vpack.c.bf16 %v2153, %v2152
  %v2218 = vpack.c.bf16 %v2155, %v2154
  %v2219 = vpack.c.bf16 %v2157, %v2156
  %v2220 = vpack.c.bf16 %v2159, %v2158
  %v2221 = vpack.c.bf16 %v2161, %v2160
  %v2222 = vpack.c.bf16 %v2163, %v2162
  %v2223 = vpack.c.bf16 %v2165, %v2164
  %v2224 = vpack.c.bf16 %v2167, %v2166
  %v2225 = vpack.c.bf16 %v2169, %v2168
  %v2226 = vpack.c.bf16 %v2171, %v2170
  %v2227 = vpack.c.bf16 %v2173, %v2172
  %v2228 = vpack.c.bf16 %v2175, %v2174
  %v2229 = vpack.c.bf16 %v2177, %v2176
  %v2230 = vpack.c.bf16 %v2179, %v2178
  %v2231 = vpack.c.bf16 %v2181, %v2180
  %v2232 = vpack.c.bf16 %v2183, %v2182
  %v2233 = vpack.c.bf16 %v2185, %v2184
  %v2234 = vpack.c.bf16 %v2187, %v2186
  %v2235 = vpack.c.bf16 %v2189, %v2188
  %v2236 = vpack.c.bf16 %v2191, %v2190
  %v2237 = vpack.c.bf16 %v2193, %v2192
  %v2238 = vpack.c.bf16 %v2195, %v2194
  %v2239 = vpack.c.bf16 %v2197, %v2196
  %v2240 = vpack.c.bf16 %v2199, %v2198
  %v2241 = vpack.c.bf16 %v2201, %v2200
  %v2242 = vpack.c.bf16 %v2203, %v2202
  %v2243 = vpack.c.bf16 %v2205, %v2204
  %v2244 = vpack.c.bf16 %v2207, %v2206
  %v2245 = vpack.c.bf16 %v2209, %v2208
  %v2246 = vpack.c.bf16 %v2211, %v2210
  %v2247 = vld [vmem:[%s9] sm:$0xf]
  %v2248 = vld [vmem:[%s9 + $0x4] sm:$0xf]
  %v2249 = vld [vmem:[%s9 + $0x8] sm:$0xf]
  %v2250 = vld [vmem:[%s9 + $0xc] sm:$0xf]
  %v2251 = vld [vmem:[%s9 + $0x10] sm:$0xf]
  %v2252 = vld [vmem:[%s9 + $0x14] sm:$0xf]
  %v2253 = vld [vmem:[%s9 + $0x18] sm:$0xf]
  %v2254 = vld [vmem:[%s9 + $0x1c] sm:$0xf]
  %v2255 = vld [vmem:[%s9 + $0x20] sm:$0xf]
  %v2256 = vld [vmem:[%s9 + $0x24] sm:$0xf]
  %v2257 = vld [vmem:[%s9 + $0x28] sm:$0xf]
  %v2258 = vld [vmem:[%s9 + $0x2c] sm:$0xf]
  %v2259 = vld [vmem:[%s9 + $0x30] sm:$0xf]
  %v2260 = vld [vmem:[%s9 + $0x34] sm:$0xf]
  %v2261 = vld [vmem:[%s9 + $0x38] sm:$0xf]
  %v2262 = vld [vmem:[%s9 + $0x3c] sm:$0xf]
  %v2263 = vld [vmem:[%s10] sm:$0x1]
  %v2265 = vlaneseq
  %v2266 = vshrl.u32 %v2265, 7
  %v2267 = vsub.s32 0, %v2266
  %v2268 = vrot.slane %v2263, %v2267
  %v2286 = vunpack.c.l.b16 %v2247
  %v2287 = vunpack.c.l.b16 %v2248
  %v2288 = vunpack.c.l.b16 %v2249
  %v2289 = vunpack.c.l.b16 %v2250
  %v2290 = vunpack.c.l.b16 %v2251
  %v2291 = vunpack.c.l.b16 %v2252
  %v2292 = vunpack.c.l.b16 %v2253
  %v2293 = vunpack.c.l.b16 %v2254
  %v2294 = vunpack.c.l.b16 %v2255
  %v2295 = vunpack.c.l.b16 %v2256
  %v2296 = vunpack.c.l.b16 %v2257
  %v2297 = vunpack.c.l.b16 %v2258
  %v2298 = vunpack.c.l.b16 %v2259
  %v2299 = vunpack.c.l.b16 %v2260
  %v2300 = vunpack.c.l.b16 %v2261
  %v2301 = vunpack.c.l.b16 %v2262
  %v2302 = vpack.c.b16 %v2287, %v2286
  %v2303 = vpack.c.b16 %v2289, %v2288
  %v2304 = vpack.c.b16 %v2291, %v2290
  %v2305 = vpack.c.b16 %v2293, %v2292
  %v2306 = vpack.c.b16 %v2295, %v2294
  %v2307 = vpack.c.b16 %v2297, %v2296
  %v2308 = vpack.c.b16 %v2299, %v2298
  %v2309 = vpack.c.b16 %v2301, %v2300
  %2318 = vmatprep.subr.bf16.mxu0 0
  %2319 = vmatpush1.bf16.msra.mxu0 %v2302
  %2320 = vmatprep.subr.bf16.mxu0 0
  %2321 = vmatpush1.bf16.msra.mxu0 %v2303
  %2322 = vmatprep.subr.bf16.mxu0 0
  %2323 = vmatpush1.bf16.msra.mxu0 %v2304
  %2324 = vmatprep.subr.bf16.mxu0 0
  %2325 = vmatpush1.bf16.msra.mxu0 %v2305
  %2326 = vmatprep.subr.bf16.mxu0 0
  %2327 = vmatpush1.bf16.msra.mxu0 %v2306
  %2328 = vmatprep.subr.bf16.mxu0 0
  %2329 = vmatpush1.bf16.msra.mxu0 %v2307
  %2330 = vmatprep.subr.bf16.mxu0 0
  %2331 = vmatpush1.bf16.msra.mxu0 %v2308
  %2332 = vmatprep.subr.bf16.mxu0 0
  %2333 = vmatpush1.bf16.msra.mxu0 %v2309
  %2334 = vmatprep.subr.bf16.mxu0 0
  %2335 = vmatpush1.bf16.msra.mxu0 0
  %2336 = vmatprep.subr.bf16.mxu0 0
  %2337 = vmatpush1.bf16.msra.mxu0 0
  %2338 = vmatprep.subr.bf16.mxu0 0
  %2339 = vmatpush1.bf16.msra.mxu0 0
  %2340 = vmatprep.subr.bf16.mxu0 0
  %2341 = vmatpush1.bf16.msra.mxu0 0
  %2342 = vmatprep.subr.bf16.mxu0 0
  %2343 = vmatpush1.bf16.msra.mxu0 0
  %2344 = vmatprep.subr.bf16.mxu0 0
  %2345 = vmatpush1.bf16.msra.mxu0 0
  %2346 = vmatprep.subr.bf16.mxu0 0
  %2347 = vmatpush1.bf16.msra.mxu0 0
  %2348 = vmatprep.subr.bf16.mxu0 0
  %2349 = vmatpush1.bf16.msra.mxu0 0
  %2350 = vmatprep.mubr.bf16.mxu0 0
  %2351 = vmatmul.mubr.bf16.gmra.mrb[0].mxu0 %v2212
  %v2352 = vpop.f32.mrb[0].mxu0
  %v2353 = vadd.f32 %v2268, %v2352
  %v2354 = vpop.f32.mrb[0].mxu0
  %v2355 = vpop.f32.mrb[0].mxu0
  %v2356 = vadd.f32 %v2268, %v2355
  %v2357 = vpop.f32.mrb[0].mxu0
  %2358 = vmatprep.mubr.bf16.mxu0 0
  %2359 = vmatmul.mubr.bf16.gmra.mrb[0].mxu0 %v2213
  %v2360 = vpop.f32.mrb[0].mxu0
  %v2361 = vadd.f32 %v2268, %v2360
  %v2362 = vpop.f32.mrb[0].mxu0
  %v2363 = vpop.f32.mrb[0].mxu0
  %v2364 = vadd.f32 %v2268, %v2363
  %v2365 = vpop.f32.mrb[0].mxu0
  %2366 = vmatprep.mubr.bf16.mxu0 0
  %2367 = vmatmul.mubr.bf16.gmra.mrb[0].mxu0 %v2214
  %v2368 = vpop.f32.mrb[0].mxu0
  %v2369 = vadd.f32 %v2268, %v2368
  %v2370 = vpop.f32.mrb[0].mxu0
  %v2371 = vpop.f32.mrb[0].mxu0
  %v2372 = vadd.f32 %v2268, %v2371
  %v2373 = vpop.f32.mrb[0].mxu0
  %2374 = vmatprep.mubr.bf16.mxu0 0
  %2375 = vmatmul.mubr.bf16.gmra.mrb[0].mxu0 %v2215
  %v2376 = vpop.f32.mrb[0].mxu0
  %v2377 = vadd.f32 %v2268, %v2376
  %v2378 = vpop.f32.mrb[0].mxu0
  %v2379 = vpop.f32.mrb[0].mxu0
  %v2380 = vadd.f32 %v2268, %v2379
  %v2381 = vpop.f32.mrb[0].mxu0
  %2382 = vmatprep.mubr.bf16.mxu0 0
  %2383 = vmatmul.mubr.bf16.gmra.mrb[0].mxu0 %v2216
  %v2384 = vpop.f32.mrb[0].mxu0
  %v2385 = vadd.f32 %v2268, %v2384
  %v2386 = vpop.f32.mrb[0].mxu0
  %v2387 = vpop.f32.mrb[0].mxu0
  %v2388 = vadd.f32 %v2268, %v2387
  %v2389 = vpop.f32.mrb[0].mxu0
  %2390 = vmatprep.mubr.bf16.mxu0 0
  %2391 = vmatmul.mubr.bf16.gmra.mrb[0].mxu0 %v2217
  %v2392 = vpop.f32.mrb[0].mxu0
  %v2393 = vadd.f32 %v2268, %v2392
  %v2394 = vpop.f32.mrb[0].mxu0
  %v2395 = vpop.f32.mrb[0].mxu0
  %v2396 = vadd.f32 %v2268, %v2395
  %v2397 = vpop.f32.mrb[0].mxu0
  %2398 = vmatprep.mubr.bf16.mxu0 0
  %2399 = vmatmul.mubr.bf16.gmra.mrb[0].mxu0 %v2218
  %v2400 = vpop.f32.mrb[0].mxu0
  %v2401 = vadd.f32 %v2268, %v2400
  %v2402 = vpop.f32.mrb[0].mxu0
  %v2403 = vpop.f32.mrb[0].mxu0
  %v2404 = vadd.f32 %v2268, %v2403
  %v2405 = vpop.f32.mrb[0].mxu0
  %2406 = vmatprep.mubr.bf16.mxu0 0
  %2407 = vmatmul.mubr.bf16.gmra.mrb[0].mxu0 %v2219
  %v2408 = vpop.f32.mrb[0].mxu0
  %v2409 = vadd.f32 %v2268, %v2408
  %v2410 = vpop.f32.mrb[0].mxu0
  %v2411 = vpop.f32.mrb[0].mxu0
  %v2412 = vadd.f32 %v2268, %v2411
  %v2413 = vpop.f32.mrb[0].mxu0
  %2414 = vmatprep.mubr.bf16.mxu0 0
  %2415 = vmatmul.mubr.bf16.gmra.mrb[0].mxu0 %v2220
  %v2416 = vpop.f32.mrb[0].mxu0
  %v2417 = vadd.f32 %v2268, %v2416
  %v2418 = vpop.f32.mrb[0].mxu0
  %v2419 = vpop.f32.mrb[0].mxu0
  %v2420 = vadd.f32 %v2268, %v2419
  %v2421 = vpop.f32.mrb[0].mxu0
  %2422 = vmatprep.mubr.bf16.mxu0 0
  %2423 = vmatmul.mubr.bf16.gmra.mrb[0].mxu0 %v2221
  %v2424 = vpop.f32.mrb[0].mxu0
  %v2425 = vadd.f32 %v2268, %v2424
  %v2426 = vpop.f32.mrb[0].mxu0
  %v2427 = vpop.f32.mrb[0].mxu0
  %v2428 = vadd.f32 %v2268, %v2427
  %v2429 = vpop.f32.mrb[0].mxu0
  %2430 = vmatprep.mubr.bf16.mxu0 0
  %2431 = vmatmul.mubr.bf16.gmra.mrb[0].mxu0 %v2222
  %v2432 = vpop.f32.mrb[0].mxu0
  %v2433 = vadd.f32 %v2268, %v2432
  %v2434 = vpop.f32.mrb[0].mxu0
  %v2435 = vpop.f32.mrb[0].mxu0
  %v2436 = vadd.f32 %v2268, %v2435
  %v2437 = vpop.f32.mrb[0].mxu0
  %2438 = vmatprep.mubr.bf16.mxu0 0
  %2439 = vmatmul.mubr.bf16.gmra.mrb[0].mxu0 %v2223
  %v2440 = vpop.f32.mrb[0].mxu0
  %v2441 = vadd.f32 %v2268, %v2440
  %v2442 = vpop.f32.mrb[0].mxu0
  %v2443 = vpop.f32.mrb[0].mxu0
  %v2444 = vadd.f32 %v2268, %v2443
  %v2445 = vpop.f32.mrb[0].mxu0
  %2446 = vmatprep.mubr.bf16.mxu0 0
  %2447 = vmatmul.mubr.bf16.gmra.mrb[0].mxu0 %v2224
  %v2448 = vpop.f32.mrb[0].mxu0
  %v2449 = vadd.f32 %v2268, %v2448
  %v2450 = vpop.f32.mrb[0].mxu0
  %v2451 = vpop.f32.mrb[0].mxu0
  %v2452 = vadd.f32 %v2268, %v2451
  %v2453 = vpop.f32.mrb[0].mxu0
  %2454 = vmatprep.mubr.bf16.mxu0 0
  %2455 = vmatmul.mubr.bf16.gmra.mrb[0].mxu0 %v2225
  %v2456 = vpop.f32.mrb[0].mxu0
  %v2457 = vadd.f32 %v2268, %v2456
  %v2458 = vpop.f32.mrb[0].mxu0
  %v2459 = vpop.f32.mrb[0].mxu0
  %v2460 = vadd.f32 %v2268, %v2459
  %v2461 = vpop.f32.mrb[0].mxu0
  %2462 = vmatprep.mubr.bf16.mxu0 0
  %2463 = vmatmul.mubr.bf16.gmra.mrb[0].mxu0 %v2226
  %v2464 = vpop.f32.mrb[0].mxu0
  %v2465 = vadd.f32 %v2268, %v2464
  %v2466 = vpop.f32.mrb[0].mxu0
  %v2467 = vpop.f32.mrb[0].mxu0
  %v2468 = vadd.f32 %v2268, %v2467
  %v2469 = vpop.f32.mrb[0].mxu0
  %2470 = vmatprep.mubr.bf16.mxu0 0
  %2471 = vmatmul.mubr.bf16.gmra.mrb[0].mxu0 %v2227
  %v2472 = vpop.f32.mrb[0].mxu0
  %v2473 = vadd.f32 %v2268, %v2472
  %v2474 = vpop.f32.mrb[0].mxu0
  %v2475 = vpop.f32.mrb[0].mxu0
  %v2476 = vadd.f32 %v2268, %v2475
  %v2477 = vpop.f32.mrb[0].mxu0
  %2478 = vmatprep.mubr.bf16.mxu0 0
  %2479 = vmatmul.mubr.bf16.gmra.mrb[0].mxu0 %v2228
  %v2480 = vpop.f32.mrb[0].mxu0
  %v2481 = vadd.f32 %v2268, %v2480
  %v2482 = vpop.f32.mrb[0].mxu0
  %v2483 = vpop.f32.mrb[0].mxu0
  %v2484 = vadd.f32 %v2268, %v2483
  %v2485 = vpop.f32.mrb[0].mxu0
  %2486 = vmatprep.mubr.bf16.mxu0 0
  %2487 = vmatmul.mubr.bf16.gmra.mrb[0].mxu0 %v2229
  %v2488 = vpop.f32.mrb[0].mxu0
  %v2489 = vadd.f32 %v2268, %v2488
  %v2490 = vpop.f32.mrb[0].mxu0
  %v2491 = vpop.f32.mrb[0].mxu0
  %v2492 = vadd.f32 %v2268, %v2491
  %v2493 = vpop.f32.mrb[0].mxu0
  %2494 = vmatprep.mubr.bf16.mxu0 0
  %2495 = vmatmul.mubr.bf16.gmra.mrb[0].mxu0 %v2230
  %v2496 = vpop.f32.mrb[0].mxu0
  %v2497 = vadd.f32 %v2268, %v2496
  %v2498 = vpop.f32.mrb[0].mxu0
  %v2499 = vpop.f32.mrb[0].mxu0
  %v2500 = vadd.f32 %v2268, %v2499
  %v2501 = vpop.f32.mrb[0].mxu0
  %2502 = vmatprep.mubr.bf16.mxu0 0
  %2503 = vmatmul.mubr.bf16.gmra.mrb[0].mxu0 %v2231
  %v2504 = vpop.f32.mrb[0].mxu0
  %v2505 = vadd.f32 %v2268, %v2504
  %v2506 = vpop.f32.mrb[0].mxu0
  %v2507 = vpop.f32.mrb[0].mxu0
  %v2508 = vadd.f32 %v2268, %v2507
  %v2509 = vpop.f32.mrb[0].mxu0
  %2510 = vmatprep.mubr.bf16.mxu0 0
  %2511 = vmatmul.mubr.bf16.gmra.mrb[0].mxu0 %v2232
  %v2512 = vpop.f32.mrb[0].mxu0
  %v2513 = vadd.f32 %v2268, %v2512
  %v2514 = vpop.f32.mrb[0].mxu0
  %v2515 = vpop.f32.mrb[0].mxu0
  %v2516 = vadd.f32 %v2268, %v2515
  %v2517 = vpop.f32.mrb[0].mxu0
  %2518 = vmatprep.mubr.bf16.mxu0 0
  %2519 = vmatmul.mubr.bf16.gmra.mrb[0].mxu0 %v2233
  %v2520 = vpop.f32.mrb[0].mxu0
  %v2521 = vadd.f32 %v2268, %v2520
  %v2522 = vpop.f32.mrb[0].mxu0
  %v2523 = vpop.f32.mrb[0].mxu0
  %v2524 = vadd.f32 %v2268, %v2523
  %v2525 = vpop.f32.mrb[0].mxu0
  %2526 = vmatprep.mubr.bf16.mxu0 0
  %2527 = vmatmul.mubr.bf16.gmra.mrb[0].mxu0 %v2234
  %v2528 = vpop.f32.mrb[0].mxu0
  %v2529 = vadd.f32 %v2268, %v2528
  %v2530 = vpop.f32.mrb[0].mxu0
  %v2531 = vpop.f32.mrb[0].mxu0
  %v2532 = vadd.f32 %v2268, %v2531
  %v2533 = vpop.f32.mrb[0].mxu0
  %2534 = vmatprep.mubr.bf16.mxu0 0
  %2535 = vmatmul.mubr.bf16.gmra.mrb[0].mxu0 %v2235
  %v2536 = vpop.f32.mrb[0].mxu0
  %v2537 = vadd.f32 %v2268, %v2536
  %v2538 = vpop.f32.mrb[0].mxu0
  %v2539 = vpop.f32.mrb[0].mxu0
  %v2540 = vadd.f32 %v2268, %v2539
  %v2541 = vpop.f32.mrb[0].mxu0
  %2542 = vmatprep.mubr.bf16.mxu0 0
  %2543 = vmatmul.mubr.bf16.gmra.mrb[0].mxu0 %v2236
  %v2544 = vpop.f32.mrb[0].mxu0
  %v2545 = vadd.f32 %v2268, %v2544
  %v2546 = vpop.f32.mrb[0].mxu0
  %v2547 = vpop.f32.mrb[0].mxu0
  %v2548 = vadd.f32 %v2268, %v2547
  %v2549 = vpop.f32.mrb[0].mxu0
  %2550 = vmatprep.mubr.bf16.mxu0 0
  %2551 = vmatmul.mubr.bf16.gmra.mrb[0].mxu0 %v2237
  %v2552 = vpop.f32.mrb[0].mxu0
  %v2553 = vadd.f32 %v2268, %v2552
  %v2554 = vpop.f32.mrb[0].mxu0
  %v2555 = vpop.f32.mrb[0].mxu0
  %v2556 = vadd.f32 %v2268, %v2555
  %v2557 = vpop.f32.mrb[0].mxu0
  %2558 = vmatprep.mubr.bf16.mxu0 0
  %2559 = vmatmul.mubr.bf16.gmra.mrb[0].mxu0 %v2238
  %v2560 = vpop.f32.mrb[0].mxu0
  %v2561 = vadd.f32 %v2268, %v2560
  %v2562 = vpop.f32.mrb[0].mxu0
  %v2563 = vpop.f32.mrb[0].mxu0
  %v2564 = vadd.f32 %v2268, %v2563
  %v2565 = vpop.f32.mrb[0].mxu0
  %2566 = vmatprep.mubr.bf16.mxu0 0
  %2567 = vmatmul.mubr.bf16.gmra.mrb[0].mxu0 %v2239
  %v2568 = vpop.f32.mrb[0].mxu0
  %v2569 = vadd.f32 %v2268, %v2568
  %v2570 = vpop.f32.mrb[0].mxu0
  %v2571 = vpop.f32.mrb[0].mxu0
  %v2572 = vadd.f32 %v2268, %v2571
  %v2573 = vpop.f32.mrb[0].mxu0
  %2574 = vmatprep.mubr.bf16.mxu0 0
  %2575 = vmatmul.mubr.bf16.gmra.mrb[0].mxu0 %v2240
  %v2576 = vpop.f32.mrb[0].mxu0
  %v2577 = vadd.f32 %v2268, %v2576
  %v2578 = vpop.f32.mrb[0].mxu0
  %v2579 = vpop.f32.mrb[0].mxu0
  %v2580 = vadd.f32 %v2268, %v2579
  %v2581 = vpop.f32.mrb[0].mxu0
  %2582 = vmatprep.mubr.bf16.mxu0 0
  %2583 = vmatmul.mubr.bf16.gmra.mrb[0].mxu0 %v2241
  %v2584 = vpop.f32.mrb[0].mxu0
  %v2585 = vadd.f32 %v2268, %v2584
  %v2586 = vpop.f32.mrb[0].mxu0
  %v2587 = vpop.f32.mrb[0].mxu0
  %v2588 = vadd.f32 %v2268, %v2587
  %v2589 = vpop.f32.mrb[0].mxu0
  %2590 = vmatprep.mubr.bf16.mxu0 0
  %2591 = vmatmul.mubr.bf16.gmra.mrb[0].mxu0 %v2242
  %v2592 = vpop.f32.mrb[0].mxu0
  %v2593 = vadd.f32 %v2268, %v2592
  %v2594 = vpop.f32.mrb[0].mxu0
  %v2595 = vpop.f32.mrb[0].mxu0
  %v2596 = vadd.f32 %v2268, %v2595
  %v2597 = vpop.f32.mrb[0].mxu0
  %2598 = vmatprep.mubr.bf16.mxu0 0
  %2599 = vmatmul.mubr.bf16.gmra.mrb[0].mxu0 %v2243
  %v2600 = vpop.f32.mrb[0].mxu0
  %v2601 = vadd.f32 %v2268, %v2600
  %v2602 = vpop.f32.mrb[0].mxu0
  %v2603 = vpop.f32.mrb[0].mxu0
  %v2604 = vadd.f32 %v2268, %v2603
  %v2605 = vpop.f32.mrb[0].mxu0
  %2606 = vmatprep.mubr.bf16.mxu0 0
  %2607 = vmatmul.mubr.bf16.gmra.mrb[0].mxu0 %v2244
  %v2608 = vpop.f32.mrb[0].mxu0
  %v2609 = vadd.f32 %v2268, %v2608
  %v2610 = vpop.f32.mrb[0].mxu0
  %v2611 = vpop.f32.mrb[0].mxu0
  %v2612 = vadd.f32 %v2268, %v2611
  %v2613 = vpop.f32.mrb[0].mxu0
  %2614 = vmatprep.mubr.bf16.mxu0 0
  %2615 = vmatmul.mubr.bf16.gmra.mrb[0].mxu0 %v2245
  %v2616 = vpop.f32.mrb[0].mxu0
  %v2617 = vadd.f32 %v2268, %v2616
  %v2618 = vpop.f32.mrb[0].mxu0
  %v2619 = vpop.f32.mrb[0].mxu0
  %v2620 = vadd.f32 %v2268, %v2619
  %v2621 = vpop.f32.mrb[0].mxu0
  %2622 = vmatprep.mubr.bf16.mxu0 0
  %2623 = vmatmul.mubr.bf16.gmra.mrb[0].mxu0 %v2246
  %v2624 = vpop.f32.mrb[0].mxu0
  %v2625 = vadd.f32 %v2268, %v2624
  %v2626 = vpop.f32.mrb[0].mxu0
  %v2627 = vpop.f32.mrb[0].mxu0
  %v2628 = vadd.f32 %v2268, %v2627
  %v2629 = vpop.f32.mrb[0].mxu0
  %2630 = vdwg.mxu0
  %2631 = vst [vmem:[%s11] sm:$0xff] %v2353
  %2632 = vst [vmem:[%s11 + $0x8] sm:$0xff] %v2356
  %2633 = vst [vmem:[%s11 + $0x10] sm:$0xff] %v2361
  %2634 = vst [vmem:[%s11 + $0x18] sm:$0xff] %v2364
  %2635 = vst [vmem:[%s11 + $0x20] sm:$0xff] %v2369
  %2636 = vst [vmem:[%s11 + $0x28] sm:$0xff] %v2372
  %2637 = vst [vmem:[%s11 + $0x30] sm:$0xff] %v2377
  %2638 = vst [vmem:[%s11 + $0x38] sm:$0xff] %v2380
  %2639 = vst [vmem:[%s11 + $0x40] sm:$0xff] %v2385
  %2640 = vst [vmem:[%s11 + $0x48] sm:$0xff] %v2388
  %2641 = vst [vmem:[%s11 + $0x50] sm:$0xff] %v2393
  %2642 = vst [vmem:[%s11 + $0x58] sm:$0xff] %v2396
  %2643 = vst [vmem:[%s11 + $0x60] sm:$0xff] %v2401
  %2644 = vst [vmem:[%s11 + $0x68] sm:$0xff] %v2404
  %2645 = vst [vmem:[%s11 + $0x70] sm:$0xff] %v2409
  %2646 = vst [vmem:[%s11 + $0x78] sm:$0xff] %v2412
  %2647 = vst [vmem:[%s11 + $0x80] sm:$0xff] %v2417
  %2648 = vst [vmem:[%s11 + $0x88] sm:$0xff] %v2420
  %2649 = vst [vmem:[%s11 + $0x90] sm:$0xff] %v2425
  %2650 = vst [vmem:[%s11 + $0x98] sm:$0xff] %v2428
  %2651 = vst [vmem:[%s11 + $0xa0] sm:$0xff] %v2433
  %2652 = vst [vmem:[%s11 + $0xa8] sm:$0xff] %v2436
  %2653 = vst [vmem:[%s11 + $0xb0] sm:$0xff] %v2441
  %2654 = vst [vmem:[%s11 + $0xb8] sm:$0xff] %v2444
  %2655 = vst [vmem:[%s11 + $0xc0] sm:$0xff] %v2449
  %2656 = vst [vmem:[%s11 + $0xc8] sm:$0xff] %v2452
  %2657 = vst [vmem:[%s11 + $0xd0] sm:$0xff] %v2457
  %2658 = vst [vmem:[%s11 + $0xd8] sm:$0xff] %v2460
  %2659 = vst [vmem:[%s11 + $0xe0] sm:$0xff] %v2465
  %2660 = vst [vmem:[%s11 + $0xe8] sm:$0xff] %v2468
  %2661 = vst [vmem:[%s11 + $0xf0] sm:$0xff] %v2473
  %2662 = vst [vmem:[%s11 + $0xf8] sm:$0xff] %v2476
  %2663 = vst [vmem:[%s11 + $0x100] sm:$0xff] %v2481
  %2664 = vst [vmem:[%s11 + $0x108] sm:$0xff] %v2484
  %2665 = vst [vmem:[%s11 + $0x110] sm:$0xff] %v2489
  %2666 = vst [vmem:[%s11 + $0x118] sm:$0xff] %v2492
  %2667 = vst [vmem:[%s11 + $0x120] sm:$0xff] %v2497
  %2668 = vst [vmem:[%s11 + $0x128] sm:$0xff] %v2500
  %2669 = vst [vmem:[%s11 + $0x130] sm:$0xff] %v2505
  %2670 = vst [vmem:[%s11 + $0x138] sm:$0xff] %v2508
  %2671 = vst [vmem:[%s11 + $0x140] sm:$0xff] %v2513
  %2672 = vst [vmem:[%s11 + $0x148] sm:$0xff] %v2516
  %2673 = vst [vmem:[%s11 + $0x150] sm:$0xff] %v2521
  %2674 = vst [vmem:[%s11 + $0x158] sm:$0xff] %v2524
  %2675 = vst [vmem:[%s11 + $0x160] sm:$0xff] %v2529
  %2676 = vst [vmem:[%s11 + $0x168] sm:$0xff] %v2532
  %2677 = vst [vmem:[%s11 + $0x170] sm:$0xff] %v2537
  %2678 = vst [vmem:[%s11 + $0x178] sm:$0xff] %v2540
  %2679 = vst [vmem:[%s11 + $0x180] sm:$0xff] %v2545
  %2680 = vst [vmem:[%s11 + $0x188] sm:$0xff] %v2548
  %2681 = vst [vmem:[%s11 + $0x190] sm:$0xff] %v2553
  %2682 = vst [vmem:[%s11 + $0x198] sm:$0xff] %v2556
  %2683 = vst [vmem:[%s11 + $0x1a0] sm:$0xff] %v2561
  %2684 = vst [vmem:[%s11 + $0x1a8] sm:$0xff] %v2564
  %2685 = vst [vmem:[%s11 + $0x1b0] sm:$0xff] %v2569
  %2686 = vst [vmem:[%s11 + $0x1b8] sm:$0xff] %v2572
  %2687 = vst [vmem:[%s11 + $0x1c0] sm:$0xff] %v2577
  %2688 = vst [vmem:[%s11 + $0x1c8] sm:$0xff] %v2580
  %2689 = vst [vmem:[%s11 + $0x1d0] sm:$0xff] %v2585
  %2690 = vst [vmem:[%s11 + $0x1d8] sm:$0xff] %v2588
  %2691 = vst [vmem:[%s11 + $0x1e0] sm:$0xff] %v2593
  %2692 = vst [vmem:[%s11 + $0x1e8] sm:$0xff] %v2596
  %2693 = vst [vmem:[%s11 + $0x1f0] sm:$0xff] %v2601
  %2694 = vst [vmem:[%s11 + $0x1f8] sm:$0xff] %v2604
  %2695 = vst [vmem:[%s11 + $0x200] sm:$0xff] %v2609
  %2696 = vst [vmem:[%s11 + $0x208] sm:$0xff] %v2612
  %2697 = vst [vmem:[%s11 + $0x210] sm:$0xff] %v2617
  %2698 = vst [vmem:[%s11 + $0x218] sm:$0xff] %v2620
  %2699 = vst [vmem:[%s11 + $0x220] sm:$0xff] %v2625
  %2700 = vst [vmem:[%s11 + $0x228] sm:$0xff] %v2628
  // Predicated region
  $region46: #{autoencoder_forward.1} parent=0 // pred_check
    _
  $region47: #{autoencoder_forward.1} parent=0 // pred_check_branch
    %2702 = sbr.rel (0) target = $region49
  $region48: #{autoencoder_forward.1} parent=0 // pred_region
    _
  $region49: #{autoencoder_forward.1} parent=0 // pred_fallthru
    _
  // Predicated region
  $region50: #{autoencoder_forward.1} parent=0 // pred_check
    _
  $region51: #{autoencoder_forward.1} parent=0 // pred_check_branch
    %2704 = sbr.rel (0) target = $region53
  $region52: #{autoencoder_forward.1} parent=0 // pred_region
    _
  $region53: #{autoencoder_forward.1} parent=0 // pred_fallthru
    _

</llo_original>
